<compile_context>
chip_gen: v7x
topology: tpu7x:2x2x1
jax: 0.10.0
libtpu: 0.0.40
codegen_flags: <defaults>
</compile_context>

<pallas_src>
import math
import jax
import jax.numpy as jnp
from jax.experimental import pallas as pl
from jax.experimental.pallas import tpu as pltpu


def _attention_kernel(num_heads, head_dim, ln_eps):
    scale = 1.0 / math.sqrt(head_dim)

    def kernel(xq_ref, xkv_ref, mask_ref,
               wq_ref, bq_ref, wk_ref, bk_ref, wv_ref, bv_ref,
               wo_ref, bo_ref, gamma_ref, beta_ref,
               o_ref):
        f32 = jnp.float32
        mm_dt = wq_ref.dtype                    # MXU operand dtype (f32 or bf16)

        xq = xq_ref[0].astype(f32)              # (tq, H)  query rows (also residual)
        xkv = xkv_ref[0].astype(f32)            # (S,  H)  full sequence for K/V
        mask = mask_ref[0].astype(f32)          # (1,  S)  additive attention mask

        tq = xq.shape[0]
        S = xkv.shape[0]
        H = num_heads * head_dim

        # ---- QKV projections (MXU, f32 accumulation) ------------------------
        q = jnp.dot(xq.astype(mm_dt), wq_ref[...],
                    preferred_element_type=f32) + bq_ref[...].astype(f32)
        k = jnp.dot(xkv.astype(mm_dt), wk_ref[...],
                    preferred_element_type=f32) + bk_ref[...].astype(f32)
        v = jnp.dot(xkv.astype(mm_dt), wv_ref[...],
                    preferred_element_type=f32) + bv_ref[...].astype(f32)

        # pre-scale q: cheaper than scaling the (nh, tq, S) scores tensor
        q = q * scale

        # split heads: (rows, H) -> (nh, rows, dh)  (layout-aware transpose)
        qh = pltpu.einshape("qhd->hqd", q.astype(mm_dt).reshape(tq, num_heads, head_dim))
        kh = pltpu.einshape("khd->hkd", k.astype(mm_dt).reshape(S, num_heads, head_dim))
        vh = pltpu.einshape("khd->hkd", v.astype(mm_dt).reshape(S, num_heads, head_dim))

        # ---- attention, batched over heads (no per-head unroll, no k.T) -----
        scores = jnp.einsum("hqd,hkd->hqk", qh, kh,
                            preferred_element_type=f32)        # (nh, tq, S)
        scores = scores + mask                                  # single broadcast add

        m = jnp.max(scores, axis=-1, keepdims=True)
        e = jnp.exp(scores - m)
        denom = jnp.sum(e, axis=-1, keepdims=True)
        probs = e * pl.reciprocal(denom, approx=True)           # EUP, not VALU divide
        # TODO(synk): attention-probs dropout is identity (eval mode)

        ctx_h = jnp.einsum("hqk,hkd->hqd", probs.astype(mm_dt), vh,
                           preferred_element_type=f32)          # (nh, tq, dh)
        ctx = pltpu.einshape("hqd->qhd", ctx_h).reshape(tq, H)  # (tq, H)

        # ---- SelfOutput: dense + (dropout=identity) + residual + LayerNorm --
        proj = jnp.dot(ctx.astype(mm_dt), wo_ref[...],
                       preferred_element_type=f32) + bo_ref[...].astype(f32)
        y = proj + xq
        u = jnp.mean(y, axis=-1, keepdims=True)
        s = jnp.mean((y - u) * (y - u), axis=-1, keepdims=True)
        y_norm = (y - u) * jax.lax.rsqrt(s + ln_eps)            # EUP rsqrt
        out = gamma_ref[...].astype(f32) * y_norm + beta_ref[...].astype(f32)

        o_ref[0] = out.astype(o_ref.dtype)

    return kernel


def _invariant_spec(shape):
    """BlockSpec for grid-invariant operands; single-buffered (constant index_map,
    double-buffering would only double their VMEM footprint)."""
    index_map = lambda b, q: (0, 0)
    try:
        return pl.BlockSpec(shape, index_map, pipeline_mode=pl.Buffered(1))
    except TypeError:  # older BlockSpec without pipeline_mode kwarg
        return pl.BlockSpec(shape, index_map)


def attention_forward(x, attention_mask, params, *, num_heads, ln_eps=1e-12,
                      block_q=256, matmul_dtype=None):
    """x: (B, S, H) float32; attention_mask: (B, 1, 1, S) additive mask.

    matmul_dtype: optional MXU operand dtype (e.g. jnp.bfloat16 on v6e/v7x);
    accumulation, softmax and LayerNorm always run in float32.
    """
    B, S, H = x.shape
    assert H % num_heads == 0
    head_dim = H // num_heads

    # query-block tiling (full-extent block when S is small / not divisible)
    tq = block_q if (S % block_q == 0) else S
    nq = S // tq

    mask = attention_mask.reshape(B, 1, S).astype(jnp.float32)

    wq, bq, wk, bk, wv, bv, wo, bo, gamma, beta = params
    if matmul_dtype is not None:
        # store weight matrices in the MXU operand dtype -> halves weight DMA bytes
        wq, wk, wv, wo = (w.astype(matmul_dtype) for w in (wq, wk, wv, wo))

    w_bytes = jnp.dtype(matmul_dtype or jnp.float32).itemsize
    cost = pl.CostEstimate(
        flops=B * (8 * S * H * H + 4 * S * S * H),
        transcendentals=B * num_heads * S * S,
        bytes_accessed=2 * B * S * H * 4 + B * S * 4 + 4 * H * H * w_bytes + 6 * H * 4,
    )

    full_mat = _invariant_spec((H, H))
    full_vec = _invariant_spec((1, H))

    return pl.pallas_call(
        _attention_kernel(num_heads, head_dim, ln_eps),
        out_shape=jax.ShapeDtypeStruct((B, S, H), x.dtype),
        grid_spec=pltpu.PrefetchScalarGridSpec(
            num_scalar_prefetch=0,
            grid=(B, nq),
            in_specs=[
                pl.BlockSpec((1, tq, H), lambda b, q: (b, q, 0)),  # x: query block
                pl.BlockSpec((1, S, H), lambda b, q: (b, 0, 0)),   # x: full seq for K/V
                pl.BlockSpec((1, 1, S), lambda b, q: (b, 0, 0)),   # additive mask
                full_mat, full_vec,                                 # Wq, bq
                full_mat, full_vec,                                 # Wk, bk
                full_mat, full_vec,                                 # Wv, bv
                full_mat, full_vec,                                 # Wo, bo
                full_vec, full_vec,                                 # gamma, beta
            ],
            out_specs=pl.BlockSpec((1, tq, H), lambda b, q: (b, q, 0)),
        ),
        compiler_params=pltpu.CompilerParams(
            dimension_semantics=("parallel", "parallel"),
            vmem_limit_bytes=64 * 1024 * 1024,
        ),
        cost_estimate=cost,
    )(x, x, mask, wq, bq, wk, bk, wv, bv, wo, bo, gamma, beta)


def init_params(key, hidden_size):
    """Deterministic synthetic parameters (nn.Linear-style, stored as (in, out))."""
    ks = jax.random.split(key, 8)
    bound = 1.0 / math.sqrt(hidden_size)

    def lin(kw, kb):
        w = jax.random.uniform(kw, (hidden_size, hidden_size), jnp.float32, -bound, bound)
        b = jax.random.uniform(kb, (1, hidden_size), jnp.float32, -bound, bound)
        return w, b

    wq, bq = lin(ks[0], ks[1])
    wk, bk = lin(ks[2], ks[3])
    wv, bv = lin(ks[4], ks[5])
    wo, bo = lin(ks[6], ks[7])
    gamma = jnp.ones((1, hidden_size), jnp.float32)
    beta = jnp.zeros((1, hidden_size), jnp.float32)
    return (wq, bq, wk, bk, wv, bv, wo, bo, gamma, beta)


def _reference(x, attention_mask, params, num_heads):
    """Pure-JAX reference mirroring the PyTorch module (dropout = identity)."""
    wq, bq, wk, bk, wv, bv, wo, bo, gamma, beta = params
    B, S, H = x.shape
    dh = H // num_heads

    def split_heads(t):  # (B,S,H) -> (B,nh,S,dh)
        return t.reshape(B, S, num_heads, dh).transpose(0, 2, 1, 3)

    q = split_heads(x @ wq + bq)
    k = split_heads(x @ wk + bk)
    v = split_heads(x @ wv + bv)
    scores = jnp.einsum("bhqd,bhkd->bhqk", q, k) / math.sqrt(dh)
    scores = scores + attention_mask  # (B,1,1,S) broadcasts
    probs = jax.nn.softmax(scores, axis=-1)
    ctx = jnp.einsum("bhqk,bhkd->bhqd", probs, v)
    ctx = ctx.transpose(0, 2, 1, 3).reshape(B, S, H)
    y = ctx @ wo + bo + x
    u = y.mean(-1, keepdims=True)
    s = ((y - u) ** 2).mean(-1, keepdims=True)
    return gamma * ((y - u) / jnp.sqrt(s + 1e-12)) + beta


if __name__ == "__main__":
    B, S, H, NH = 2, 8, 32, 4
    key = jax.random.PRNGKey(0)
    kx, km, kp = jax.random.split(key, 3)

    x = jax.random.normal(kx, (B, S, H), jnp.float32)
    # Additive attention mask: 0 for attended positions, -10000 for masked ones.
    keep = (jax.random.uniform(km, (B, 1, 1, S)) > 0.2).astype(jnp.float32)
    attention_mask = (1.0 - keep) * -10000.0

    params = init_params(kp, H)
    ref = _reference(x, attention_mask, params, NH)

    # Exact path: f32 MXU operands (matches the PyTorch module numerics).
    out = attention_forward(x, attention_mask, params, num_heads=NH)
    out = jax.block_until_ready(out)
    assert out.shape == (B, S, H)
    assert jnp.allclose(out, ref, atol=1e-2, rtol=1e-2), "f32 kernel mismatch vs reference"

    # Production path for v6e/v7x: bf16 MXU operands, f32 accumulation / softmax / LN.
    out_bf16 = attention_forward(x, attention_mask, params, num_heads=NH,
                                 matmul_dtype=jnp.bfloat16)
    out_bf16 = jax.block_until_ready(out_bf16)
    assert jnp.allclose(out_bf16, ref, atol=5e-2, rtol=5e-2), "bf16 kernel mismatch vs reference"

    print("KERNEL_OK")
</pallas_src>

<mosaic_0001>
module attributes {stable_mosaic.version = 11 : i64} {
  func.func @kernel(%arg0: i32, %arg1: i32, %arg2: memref<1x8x32xf32, #tpu.memory_space<vmem>>, %arg3: memref<1x8x32xf32, #tpu.memory_space<vmem>>, %arg4: memref<1x1x8xf32, #tpu.memory_space<vmem>>, %arg5: memref<32x32xf32, #tpu.memory_space<vmem>>, %arg6: memref<1x32xf32, #tpu.memory_space<vmem>>, %arg7: memref<32x32xf32, #tpu.memory_space<vmem>>, %arg8: memref<1x32xf32, #tpu.memory_space<vmem>>, %arg9: memref<32x32xf32, #tpu.memory_space<vmem>>, %arg10: memref<1x32xf32, #tpu.memory_space<vmem>>, %arg11: memref<32x32xf32, #tpu.memory_space<vmem>>, %arg12: memref<1x32xf32, #tpu.memory_space<vmem>>, %arg13: memref<1x32xf32, #tpu.memory_space<vmem>>, %arg14: memref<1x32xf32, #tpu.memory_space<vmem>>, %arg15: memref<1x8x32xf32, #tpu.memory_space<vmem>>) attributes {dimension_semantics = [#tpu.dimension_semantics<parallel>, #tpu.dimension_semantics<parallel>], iteration_bounds = array<i64: 2, 1>, scalar_prefetch = 0 : i64, scratch_operands = 0 : i64, tpu.core_type = #tpu.core_type<tc>, window_params = [{transform_indices = @transform_0, window_bounds = array<i64: 1, 8, 32>}, {transform_indices = @transform_1, window_bounds = array<i64: 1, 8, 32>}, {transform_indices = @transform_2, window_bounds = array<i64: 1, 1, 8>}, {pipeline_mode = #tpu.pipeline_mode<synchronous>, transform_indices = @transform_3, window_bounds = array<i64: 32, 32>}, {pipeline_mode = #tpu.pipeline_mode<synchronous>, transform_indices = @transform_4, window_bounds = array<i64: 1, 32>}, {pipeline_mode = #tpu.pipeline_mode<synchronous>, transform_indices = @transform_5, window_bounds = array<i64: 32, 32>}, {pipeline_mode = #tpu.pipeline_mode<synchronous>, transform_indices = @transform_6, window_bounds = array<i64: 1, 32>}, {pipeline_mode = #tpu.pipeline_mode<synchronous>, transform_indices = @transform_7, window_bounds = array<i64: 32, 32>}, {pipeline_mode = #tpu.pipeline_mode<synchronous>, transform_indices = @transform_8, window_bounds = array<i64: 1, 32>}, {pipeline_mode = #tpu.pipeline_mode<synchronous>, transform_indices = @transform_9, window_bounds = array<i64: 32, 32>}, {pipeline_mode = #tpu.pipeline_mode<synchronous>, transform_indices = @transform_10, window_bounds = array<i64: 1, 32>}, {pipeline_mode = #tpu.pipeline_mode<synchronous>, transform_indices = @transform_11, window_bounds = array<i64: 1, 32>}, {pipeline_mode = #tpu.pipeline_mode<synchronous>, transform_indices = @transform_12, window_bounds = array<i64: 1, 32>}, {transform_indices = @transform_13, window_bounds = array<i64: 1, 8, 32>}]} {
    %c0 = arith.constant 0 : index
    %c0_0 = arith.constant 0 : index
    %c0_1 = arith.constant 0 : index
    %0 = vector.load %arg2[%c0, %c0_0, %c0_1] : memref<1x8x32xf32, #tpu.memory_space<vmem>>, vector<1x8x32xf32>
    %1 = vector.shape_cast %0 : vector<1x8x32xf32> to vector<8x32xf32>
    %c0_2 = arith.constant 0 : index
    %c0_3 = arith.constant 0 : index
    %c0_4 = arith.constant 0 : index
    %2 = vector.load %arg3[%c0_2, %c0_3, %c0_4] : memref<1x8x32xf32, #tpu.memory_space<vmem>>, vector<1x8x32xf32>
    %3 = vector.shape_cast %2 : vector<1x8x32xf32> to vector<8x32xf32>
    %c0_5 = arith.constant 0 : index
    %c0_6 = arith.constant 0 : index
    %c0_7 = arith.constant 0 : index
    %4 = vector.load %arg4[%c0_5, %c0_6, %c0_7] : memref<1x1x8xf32, #tpu.memory_space<vmem>>, vector<1x1x8xf32>
    %5 = vector.shape_cast %4 : vector<1x1x8xf32> to vector<1x8xf32>
    %c0_8 = arith.constant 0 : index
    %c0_9 = arith.constant 0 : index
    %6 = vector.load %arg5[%c0_8, %c0_9] : memref<32x32xf32, #tpu.memory_space<vmem>>, vector<32x32xf32>
    %cst = arith.constant dense<0.000000e+00> : vector<8x32xf32>
    %7 = tpu.matmul %1, %6, %cst {dimension_numbers = #tpu.dot_dimension_numbers<[1], [0], [0], [1], [0, 0, 1, 1], [], []>} : vector<8x32xf32>, vector<32x32xf32>, vector<8x32xf32> -> vector<8x32xf32>
    %c0_10 = arith.constant 0 : index
    %c0_11 = arith.constant 0 : index
    %8 = vector.load %arg6[%c0_10, %c0_11] : memref<1x32xf32, #tpu.memory_space<vmem>>, vector<1x32xf32>
    %9 = vector.broadcast %8 : vector<1x32xf32> to vector<8x32xf32>
    %10 = arith.addf %7, %9 : vector<8x32xf32>
    %c0_12 = arith.constant 0 : index
    %c0_13 = arith.constant 0 : index
    %11 = vector.load %arg7[%c0_12, %c0_13] : memref<32x32xf32, #tpu.memory_space<vmem>>, vector<32x32xf32>
    %cst_14 = arith.constant dense<0.000000e+00> : vector<8x32xf32>
    %12 = tpu.matmul %3, %11, %cst_14 {dimension_numbers = #tpu.dot_dimension_numbers<[1], [0], [0], [1], [0, 0, 1, 1], [], []>} : vector<8x32xf32>, vector<32x32xf32>, vector<8x32xf32> -> vector<8x32xf32>
    %c0_15 = arith.constant 0 : index
    %c0_16 = arith.constant 0 : index
    %13 = vector.load %arg8[%c0_15, %c0_16] : memref<1x32xf32, #tpu.memory_space<vmem>>, vector<1x32xf32>
    %14 = vector.broadcast %13 : vector<1x32xf32> to vector<8x32xf32>
    %15 = arith.addf %12, %14 : vector<8x32xf32>
    %c0_17 = arith.constant 0 : index
    %c0_18 = arith.constant 0 : index
    %16 = vector.load %arg9[%c0_17, %c0_18] : memref<32x32xf32, #tpu.memory_space<vmem>>, vector<32x32xf32>
    %cst_19 = arith.constant dense<0.000000e+00> : vector<8x32xf32>
    %17 = tpu.matmul %3, %16, %cst_19 {dimension_numbers = #tpu.dot_dimension_numbers<[1], [0], [0], [1], [0, 0, 1, 1], [], []>} : vector<8x32xf32>, vector<32x32xf32>, vector<8x32xf32> -> vector<8x32xf32>
    %c0_20 = arith.constant 0 : index
    %c0_21 = arith.constant 0 : index
    %18 = vector.load %arg10[%c0_20, %c0_21] : memref<1x32xf32, #tpu.memory_space<vmem>>, vector<1x32xf32>
    %19 = vector.broadcast %18 : vector<1x32xf32> to vector<8x32xf32>
    %20 = arith.addf %17, %19 : vector<8x32xf32>
    %cst_22 = arith.constant 0.353553385 : f32
    %21 = vector.broadcast %cst_22 : f32 to vector<8x32xf32>
    %22 = arith.mulf %10, %21 : vector<8x32xf32>
    %23 = vector.shape_cast %22 : vector<8x32xf32> to vector<8x4x8xf32>
    %24 = tpu.transpose %23, [1, 0, 2] : vector<8x4x8xf32> -> vector<4x8x8xf32>
    %25 = vector.shape_cast %15 : vector<8x32xf32> to vector<8x4x8xf32>
    %26 = tpu.transpose %25, [1, 0, 2] : vector<8x4x8xf32> -> vector<4x8x8xf32>
    %27 = vector.shape_cast %20 : vector<8x32xf32> to vector<8x4x8xf32>
    %28 = tpu.transpose %27, [1, 0, 2] : vector<8x4x8xf32> -> vector<4x8x8xf32>
    "tpu.trace_start"() <{level = 10 : i32, message = "hqd,hkd->hqk"}> : () -> ()
    %cst_23 = arith.constant dense<0.000000e+00> : vector<4x8x8xf32>
    %29 = tpu.matmul %24, %26, %cst_23 {dimension_numbers = #tpu.dot_dimension_numbers<[2], [2], [1], [1], [0, 0, 0, 1, 1, 1], [0], [0]>} : vector<4x8x8xf32>, vector<4x8x8xf32>, vector<4x8x8xf32> -> vector<4x8x8xf32>
    "tpu.trace_stop"() : () -> ()
    %30 = vector.shape_cast %5 : vector<1x8xf32> to vector<1x1x8xf32>
    %31 = vector.broadcast %30 : vector<1x1x8xf32> to vector<4x8x8xf32>
    %32 = arith.addf %29, %31 : vector<4x8x8xf32>
    %cst_24 = arith.constant dense<0xFF800000> : vector<4x8xf32>
    %33 = vector.multi_reduction <maximumf>, %32, %cst_24 [2] : vector<4x8x8xf32> to vector<4x8xf32>
    %34 = vector.shape_cast %33 : vector<4x8xf32> to vector<4x8x1xf32>
    %35 = vector.broadcast %34 : vector<4x8x1xf32> to vector<4x8x8xf32>
    %36 = arith.subf %32, %35 : vector<4x8x8xf32>
    %37 = math.exp %36 : vector<4x8x8xf32>
    %cst_25 = arith.constant dense<0.000000e+00> : vector<4x8xf32>
    %38 = vector.multi_reduction <add>, %37, %cst_25 [2] : vector<4x8x8xf32> to vector<4x8xf32>
    %39 = vector.shape_cast %38 : vector<4x8xf32> to vector<4x8x1xf32>
    %40 = tpu.reciprocal %39 {approx = true} : vector<4x8x1xf32> -> vector<4x8x1xf32>
    %41 = vector.broadcast %40 : vector<4x8x1xf32> to vector<4x8x8xf32>
    %42 = arith.mulf %37, %41 : vector<4x8x8xf32>
    "tpu.trace_start"() <{level = 10 : i32, message = "hqk,hkd->hqd"}> : () -> ()
    %cst_26 = arith.constant dense<0.000000e+00> : vector<4x8x8xf32>
    %43 = tpu.matmul %42, %28, %cst_26 {dimension_numbers = #tpu.dot_dimension_numbers<[2], [1], [1], [2], [0, 0, 0, 1, 1, 2], [0], [0]>} : vector<4x8x8xf32>, vector<4x8x8xf32>, vector<4x8x8xf32> -> vector<4x8x8xf32>
    "tpu.trace_stop"() : () -> ()
    %44 = tpu.transpose %43, [1, 0, 2] : vector<4x8x8xf32> -> vector<8x4x8xf32>
    %45 = vector.shape_cast %44 : vector<8x4x8xf32> to vector<8x32xf32>
    %c0_27 = arith.constant 0 : index
    %c0_28 = arith.constant 0 : index
    %46 = vector.load %arg11[%c0_27, %c0_28] : memref<32x32xf32, #tpu.memory_space<vmem>>, vector<32x32xf32>
    %cst_29 = arith.constant dense<0.000000e+00> : vector<8x32xf32>
    %47 = tpu.matmul %45, %46, %cst_29 {dimension_numbers = #tpu.dot_dimension_numbers<[1], [0], [0], [1], [0, 0, 1, 1], [], []>} : vector<8x32xf32>, vector<32x32xf32>, vector<8x32xf32> -> vector<8x32xf32>
    %c0_30 = arith.constant 0 : index
    %c0_31 = arith.constant 0 : index
    %48 = vector.load %arg12[%c0_30, %c0_31] : memref<1x32xf32, #tpu.memory_space<vmem>>, vector<1x32xf32>
    %49 = vector.broadcast %48 : vector<1x32xf32> to vector<8x32xf32>
    %50 = arith.addf %47, %49 : vector<8x32xf32>
    %51 = arith.addf %50, %1 : vector<8x32xf32>
    %cst_32 = arith.constant dense<0.000000e+00> : vector<8xf32>
    %52 = vector.multi_reduction <add>, %51, %cst_32 [1] : vector<8x32xf32> to vector<8xf32>
    %53 = vector.shape_cast %52 : vector<8xf32> to vector<8x1xf32>
    %cst_33 = arith.constant 3.200000e+01 : f32
    %54 = vector.broadcast %cst_33 : f32 to vector<8x1xf32>
    %55 = arith.divf %53, %54 : vector<8x1xf32>
    %56 = vector.broadcast %55 : vector<8x1xf32> to vector<8x32xf32>
    %57 = arith.subf %51, %56 : vector<8x32xf32>
    %58 = vector.broadcast %55 : vector<8x1xf32> to vector<8x32xf32>
    %59 = arith.subf %51, %58 : vector<8x32xf32>
    %60 = arith.mulf %57, %59 : vector<8x32xf32>
    %cst_34 = arith.constant dense<0.000000e+00> : vector<8xf32>
    %61 = vector.multi_reduction <add>, %60, %cst_34 [1] : vector<8x32xf32> to vector<8xf32>
    %62 = vector.shape_cast %61 : vector<8xf32> to vector<8x1xf32>
    %cst_35 = arith.constant 3.200000e+01 : f32
    %63 = vector.broadcast %cst_35 : f32 to vector<8x1xf32>
    %64 = arith.divf %62, %63 : vector<8x1xf32>
    %65 = vector.broadcast %55 : vector<8x1xf32> to vector<8x32xf32>
    %66 = arith.subf %51, %65 : vector<8x32xf32>
    %cst_36 = arith.constant 9.99999996E-13 : f32
    %67 = vector.broadcast %cst_36 : f32 to vector<8x1xf32>
    %68 = arith.addf %64, %67 : vector<8x1xf32>
    %69 = math.rsqrt %68 : vector<8x1xf32>
    %70 = vector.broadcast %69 : vector<8x1xf32> to vector<8x32xf32>
    %71 = arith.mulf %66, %70 : vector<8x32xf32>
    %c0_37 = arith.constant 0 : index
    %c0_38 = arith.constant 0 : index
    %72 = vector.load %arg13[%c0_37, %c0_38] : memref<1x32xf32, #tpu.memory_space<vmem>>, vector<1x32xf32>
    %73 = vector.broadcast %72 : vector<1x32xf32> to vector<8x32xf32>
    %74 = arith.mulf %73, %71 : vector<8x32xf32>
    %c0_39 = arith.constant 0 : index
    %c0_40 = arith.constant 0 : index
    %75 = vector.load %arg14[%c0_39, %c0_40] : memref<1x32xf32, #tpu.memory_space<vmem>>, vector<1x32xf32>
    %76 = vector.broadcast %75 : vector<1x32xf32> to vector<8x32xf32>
    %77 = arith.addf %74, %76 : vector<8x32xf32>
    %c0_41 = arith.constant 0 : index
    %c0_42 = arith.constant 0 : index
    %c0_43 = arith.constant 0 : index
    %78 = vector.load %arg15[%c0_41, %c0_42, %c0_43] : memref<1x8x32xf32, #tpu.memory_space<vmem>>, vector<1x8x32xf32>
    %79 = vector.shape_cast %78 : vector<1x8x32xf32> to vector<8x32xf32>
    %80 = vector.shape_cast %77 : vector<8x32xf32> to vector<1x8x32xf32>
    tpu.vector_store %arg15[%c0_41, %c0_42, %c0_43], %80 {strides = array<i32>} : memref<1x8x32xf32, #tpu.memory_space<vmem>>, vector<1x8x32xf32>,
    return
  }
  func.func @transform_0(%arg0: i32, %arg1: i32) -> (i32, i32, i32) {
    %c0_i32 = arith.constant 0 : i32
    %c0_i32_0 = arith.constant 0 : i32
    return %arg0, %arg1, %c0_i32 : i32, i32, i32
  }
  func.func @transform_1(%arg0: i32, %arg1: i32) -> (i32, i32, i32) {
    %c0_i32 = arith.constant 0 : i32
    %c0_i32_0 = arith.constant 0 : i32
    %c0_i32_1 = arith.constant 0 : i32
    return %arg0, %c0_i32, %c0_i32_0 : i32, i32, i32
  }
  func.func @transform_2(%arg0: i32, %arg1: i32) -> (i32, i32, i32) {
    %c0_i32 = arith.constant 0 : i32
    %c0_i32_0 = arith.constant 0 : i32
    %c0_i32_1 = arith.constant 0 : i32
    return %arg0, %c0_i32, %c0_i32_0 : i32, i32, i32
  }
  func.func @transform_3(%arg0: i32, %arg1: i32) -> (i32, i32) {
    %c0_i32 = arith.constant 0 : i32
    %c0_i32_0 = arith.constant 0 : i32
    %c0_i32_1 = arith.constant 0 : i32
    return %c0_i32, %c0_i32_0 : i32, i32
  }
  func.func @transform_4(%arg0: i32, %arg1: i32) -> (i32, i32) {
    %c0_i32 = arith.constant 0 : i32
    %c0_i32_0 = arith.constant 0 : i32
    %c0_i32_1 = arith.constant 0 : i32
    return %c0_i32, %c0_i32_0 : i32, i32
  }
  func.func @transform_5(%arg0: i32, %arg1: i32) -> (i32, i32) {
    %c0_i32 = arith.constant 0 : i32
    %c0_i32_0 = arith.constant 0 : i32
    %c0_i32_1 = arith.constant 0 : i32
    return %c0_i32, %c0_i32_0 : i32, i32
  }
  func.func @transform_6(%arg0: i32, %arg1: i32) -> (i32, i32) {
    %c0_i32 = arith.constant 0 : i32
    %c0_i32_0 = arith.constant 0 : i32
    %c0_i32_1 = arith.constant 0 : i32
    return %c0_i32, %c0_i32_0 : i32, i32
  }
  func.func @transform_7(%arg0: i32, %arg1: i32) -> (i32, i32) {
    %c0_i32 = arith.constant 0 : i32
    %c0_i32_0 = arith.constant 0 : i32
    %c0_i32_1 = arith.constant 0 : i32
    return %c0_i32, %c0_i32_0 : i32, i32
  }
  func.func @transform_8(%arg0: i32, %arg1: i32) -> (i32, i32) {
    %c0_i32 = arith.constant 0 : i32
    %c0_i32_0 = arith.constant 0 : i32
    %c0_i32_1 = arith.constant 0 : i32
    return %c0_i32, %c0_i32_0 : i32, i32
  }
  func.func @transform_9(%arg0: i32, %arg1: i32) -> (i32, i32) {
    %c0_i32 = arith.constant 0 : i32
    %c0_i32_0 = arith.constant 0 : i32
    %c0_i32_1 = arith.constant 0 : i32
    return %c0_i32, %c0_i32_0 : i32, i32
  }
  func.func @transform_10(%arg0: i32, %arg1: i32) -> (i32, i32) {
    %c0_i32 = arith.constant 0 : i32
    %c0_i32_0 = arith.constant 0 : i32
    %c0_i32_1 = arith.constant 0 : i32
    return %c0_i32, %c0_i32_0 : i32, i32
  }
  func.func @transform_11(%arg0: i32, %arg1: i32) -> (i32, i32) {
    %c0_i32 = arith.constant 0 : i32
    %c0_i32_0 = arith.constant 0 : i32
    %c0_i32_1 = arith.constant 0 : i32
    return %c0_i32, %c0_i32_0 : i32, i32
  }
  func.func @transform_12(%arg0: i32, %arg1: i32) -> (i32, i32) {
    %c0_i32 = arith.constant 0 : i32
    %c0_i32_0 = arith.constant 0 : i32
    %c0_i32_1 = arith.constant 0 : i32
    return %c0_i32, %c0_i32_0 : i32, i32
  }
  func.func @transform_13(%arg0: i32, %arg1: i32) -> (i32, i32, i32) {
    %c0_i32 = arith.constant 0 : i32
    %c0_i32_0 = arith.constant 0 : i32
    return %arg0, %arg1, %c0_i32 : i32, i32, i32
  }
}

</mosaic_0001>

<llo_original>
// kernel: tpu_custom_call.1
$region0: #{tpu_custom_call.1}
  #allocation0 [shape = 'u32[]', space=smem, size = 0x4, offset = 0x4, fixed_abs, tag = 'smem constant byte address 0x4 - core index']
  #allocation1 [shape = 'u32[144,128]{1,0:T(1,128)}', space=vmem, size = 0x12000, scoped, tag = 'internal scratch']
  %s0 = inlined_call_operand.hbm [shape: f32[2,8,32], index: 0, kind: input, shape index: {}]
  %s1 = inlined_call_operand.hbm [shape: f32[2,8,32], index: 1, kind: input, shape index: {}]
  %s2 = inlined_call_operand.hbm [shape: f32[2,1,8], index: 2, kind: input, shape index: {}]
  %s3 = inlined_call_operand.hbm [shape: f32[32,32], index: 3, kind: input, shape index: {}]
  %s4 = inlined_call_operand.hbm [shape: f32[1,32], index: 4, kind: input, shape index: {}]
  %s5 = inlined_call_operand.hbm [shape: f32[32,32], index: 5, kind: input, shape index: {}]
  %s6 = inlined_call_operand.hbm [shape: f32[1,32], index: 6, kind: input, shape index: {}]
  %s7 = inlined_call_operand.hbm [shape: f32[32,32], index: 7, kind: input, shape index: {}]
  %s8 = inlined_call_operand.hbm [shape: f32[1,32], index: 8, kind: input, shape index: {}]
  %s9 = inlined_call_operand.hbm [shape: f32[32,32], index: 9, kind: input, shape index: {}]
  %s10 = inlined_call_operand.hbm [shape: f32[1,32], index: 10, kind: input, shape index: {}]
  %s11 = inlined_call_operand.hbm [shape: f32[1,32], index: 11, kind: input, shape index: {}]
  %s12 = inlined_call_operand.hbm [shape: f32[1,32], index: 12, kind: input, shape index: {}]
  %s13 = inlined_call_operand.hbm [shape: f32[2,8,32], index: 13, kind: output, shape index: {}]
  %s14 = sld [smem:[#allocation0]]
  $region137: #{tpu_custom_call.1} parent=0
    _
  %s16 = ssub.s32 1, %s14
  %s17 = scalar_select 0, %s16, %s14
  $region1: #{tpu_custom_call.1} parent=0
    #allocation2 [shape = 'u8[8192]{0}', space=vmem, size = 0x2000, scoped, tag = 'input window, operand 0']
    #allocation3 [shape = 's32[2]{0}', space=sflag, size = 0x8, scoped, tag = 'scoped memory for tpu_custom_call.1']
    #allocation4 [shape = 's32[2]{0}', space=sflag, size = 0x8, scoped, tag = 'scoped memory for tpu_custom_call.1']
    #allocation5 [shape = 'u8[8192]{0}', space=vmem, size = 0x2000, scoped, tag = 'input window, operand 1']
    #allocation6 [shape = 's32[2]{0}', space=sflag, size = 0x8, scoped, tag = 'scoped memory for tpu_custom_call.1']
    #allocation7 [shape = 'u8[1024]{0}', space=vmem, size = 0x400, scoped, tag = 'input window, operand 2']
    #allocation8 [shape = 'u8[16384]{0}', space=vmem, size = 0x4000, scoped, tag = 'input window, operand 3, single buffered']
    #allocation9 [shape = 's32[1]{0}', space=sflag, size = 0x4, scoped, tag = 'scoped memory for tpu_custom_call.1']
    #allocation10 [shape = 'u8[512]{0}', space=vmem, size = 0x400, scoped, tag = 'input window, operand 4, single buffered']
    #allocation11 [shape = 'u8[16384]{0}', space=vmem, size = 0x4000, scoped, tag = 'input window, operand 5, single buffered']
    #allocation12 [shape = 's32[1]{0}', space=sflag, size = 0x4, scoped, tag = 'scoped memory for tpu_custom_call.1']
    #allocation13 [shape = 'u8[512]{0}', space=vmem, size = 0x400, scoped, tag = 'input window, operand 6, single buffered']
    #allocation14 [shape = 'u8[16384]{0}', space=vmem, size = 0x4000, scoped, tag = 'input window, operand 7, single buffered']
    #allocation15 [shape = 's32[1]{0}', space=sflag, size = 0x4, scoped, tag = 'scoped memory for tpu_custom_call.1']
    #allocation16 [shape = 'u8[512]{0}', space=vmem, size = 0x400, scoped, tag = 'input window, operand 8, single buffered']
    #allocation17 [shape = 'u8[16384]{0}', space=vmem, size = 0x4000, scoped, tag = 'input window, operand 9, single buffered']
    #allocation18 [shape = 's32[1]{0}', space=sflag, size = 0x4, scoped, tag = 'scoped memory for tpu_custom_call.1']
    #allocation19 [shape = 'u8[512]{0}', space=vmem, size = 0x400, scoped, tag = 'input window, operand 10, single buffered']
    #allocation20 [shape = 'u8[512]{0}', space=vmem, size = 0x400, scoped, tag = 'input window, operand 11, single buffered']
    #allocation21 [shape = 's32[1]{0}', space=sflag, size = 0x4, scoped, tag = 'scoped memory for tpu_custom_call.1']
    #allocation22 [shape = 'u8[512]{0}', space=vmem, size = 0x400, scoped, tag = 'input window, operand 12, single buffered']
    #allocation23 [shape = 'u8[8192]{0}', space=vmem, size = 0x2000, scoped, tag = 'output window, operand 0']
    %18 = vsyncpa [#allocation3], 0
    %s19 = scalar_lea.sflag [#allocation3], 1
    %20 = vsyncpa %s19, 0
    %21 = vsyncpa [#allocation6], 0
    %s22 = scalar_lea.sflag [#allocation6], 1
    %23 = vsyncpa %s22, 0
    %24 = vsyncpa [#allocation9], 0
    %25 = vsyncpa [#allocation12], 0
    %26 = vsyncpa [#allocation15], 0
    %27 = vsyncpa [#allocation18], 0
    %28 = vsyncpa [#allocation21], 0
    %29 = vsyncpa [#allocation4], 0
    %s30 = scalar_lea.sflag [#allocation4], 1
    %31 = vsyncpa %s30, 0
    loop: start=0, step=1, limit=4
    $region2: #{tpu_custom_call.1} parent=1 // loop_pre_header
      _
    $region3: #{tpu_custom_call.1} parent=1 // loop_header
      %s33 = sphi 0, %s37
      %p34 = scmp.ge.s32.totalorder %s33, 4
      %s40 = sphi 0, %s52
      %s41 = sphi 0, %s48
      %s42 = sphi 0, %s40
      %s43 = sphi 0, %s41
      %s44 = sphi 0, %s42
      %s45 = sphi 0, %s43
      %s57 = sphi 0, %s59
      %s60 = sphi 0, %s57
      %s61 = sphi 0, %s60
      %s77 = sphi 0, %s61
      %s83 = sphi 0, %s85
      %s86 = sphi 0, %s83
      %s87 = sphi 0, %s86
      %s103 = sphi 0, %s87
      %s109 = sphi 0, %s111
      %s112 = sphi 0, %s109
      %s113 = sphi 0, %s112
      %s129 = sphi 0, %s113
      %s133 = sphi 0, %s133
      %s135 = sphi 0, %s133
      %s136 = sphi 0, %s135
      %s150 = sphi 0, %s136
      %s154 = sphi 0, %s154
      %s156 = sphi 0, %s154
      %s157 = sphi 0, %s156
      %s171 = sphi 0, %s157
      %s175 = sphi 0, %s175
      %s177 = sphi 0, %s175
      %s178 = sphi 0, %s177
      %s192 = sphi 0, %s178
      %s196 = sphi 0, %s196
      %s198 = sphi 0, %s196
      %s199 = sphi 0, %s198
      %s213 = sphi 0, %s199
      %s217 = sphi 0, %s217
      %s219 = sphi 0, %s217
      %s220 = sphi 0, %s219
      %s234 = sphi 0, %s220
      %s238 = sphi 0, %s238
      %s240 = sphi 0, %s238
      %s241 = sphi 0, %s240
      %s255 = sphi 0, %s241
      %s259 = sphi 0, %s259
      %s261 = sphi 0, %s259
      %s262 = sphi 0, %s261
      %s276 = sphi 0, %s262
      %s280 = sphi 0, %s280
      %s282 = sphi 0, %s280
      %s283 = sphi 0, %s282
      %s297 = sphi 0, %s283
      %s301 = sphi 0, %s301
      %s303 = sphi 0, %s301
      %s304 = sphi 0, %s303
      %s318 = sphi 0, %s304
      %s322 = sphi 0, %s322
      %s324 = sphi 0, %s322
      %s325 = sphi 0, %s324
      %s339 = sphi 0, %s325
      %s347 = sphi 0, %s349
      %s350 = sphi 0, %s347
      %s351 = sphi 0, %s350
      %s367 = sphi 0, %s351
    $region4: #{tpu_custom_call.1} parent=1 // loop_header_branch
      %36 = sbr.rel (%p34) target = $region8
    $region5: #{tpu_custom_call.1} parent=1 // loop_body
      %s38 = ssub.s32 %s33, 1
      %s39 = ssub.s32 %s33, 2
      %s46 = sadd.s32 1, %s41
      %p47 = scmp.ge.s32.totalorder %s46, 1
      %s48 = scalar_select %p47, 0, %s46
      %s49 = sadd.s32 1, %s40
      %s50 = scalar_select %p47, %s49, %s40
      %p51 = scmp.ge.s32.totalorder %s50, 2
      %s52 = scalar_select %p51, 0, %s50
      %s53 = ssub.s32 %s40, %s52
      %s54 = ssub.s32 %s41, %s48
      %s55 = sor.u32 %s53, %s54
      %p56 = scmp.eq.s32.totalorder %s55, 0
      %s58 = sadd.s32 %s57, 1
      %s59 = scalar_select %p56, %s57, %s58
      %p62 = pneg %p56
      %p63 = scmp.eq.s32.totalorder %s33, 1
      %p64 = por %p62, %p63
      %p65 = scmp.ne.s32.totalorder %s57, %s60
      %p66 = scmp.eq.s32.totalorder %s33, 0
      %p67 = por %p65, %p66
      %p68 = scmp.ne.s32.totalorder %s57, %s60
      %p69 = scmp.eq.s32.totalorder %s38, 1
      %p70 = por %p68, %p69
      %p71 = scmp.ne.s32.totalorder %s60, %s61
      %p72 = scmp.eq.s32.totalorder %s38, 0
      %p73 = por %p71, %p72
      %p74 = scmp.ne.s32.totalorder %s60, %s61
      %p75 = scmp.eq.s32.totalorder %s39, 1
      %p76 = por %p74, %p75
      %p78 = scmp.ne.s32.totalorder %s61, %s77
      %p79 = scmp.eq.s32.totalorder %s39, 0
      %p80 = por %p78, %p79
      %s81 = ssub.s32 %s40, %s52
      %p82 = scmp.eq.s32.totalorder %s81, 0
      %s84 = sadd.s32 %s83, 1
      %s85 = scalar_select %p82, %s83, %s84
      %p88 = pneg %p82
      %p89 = scmp.eq.s32.totalorder %s33, 1
      %p90 = por %p88, %p89
      %p91 = scmp.ne.s32.totalorder %s83, %s86
      %p92 = scmp.eq.s32.totalorder %s33, 0
      %p93 = por %p91, %p92
      %p94 = scmp.ne.s32.totalorder %s83, %s86
      %p95 = scmp.eq.s32.totalorder %s38, 1
      %p96 = por %p94, %p95
      %p97 = scmp.ne.s32.totalorder %s86, %s87
      %p98 = scmp.eq.s32.totalorder %s38, 0
      %p99 = por %p97, %p98
      %p100 = scmp.ne.s32.totalorder %s86, %s87
      %p101 = scmp.eq.s32.totalorder %s39, 1
      %p102 = por %p100, %p101
      %p104 = scmp.ne.s32.totalorder %s87, %s103
      %p105 = scmp.eq.s32.totalorder %s39, 0
      %p106 = por %p104, %p105
      %s107 = ssub.s32 %s40, %s52
      %p108 = scmp.eq.s32.totalorder %s107, 0
      %s110 = sadd.s32 %s109, 1
      %s111 = scalar_select %p108, %s109, %s110
      %p114 = pneg %p108
      %p115 = scmp.eq.s32.totalorder %s33, 1
      %p116 = por %p114, %p115
      %p117 = scmp.ne.s32.totalorder %s109, %s112
      %p118 = scmp.eq.s32.totalorder %s33, 0
      %p119 = por %p117, %p118
      %p120 = scmp.ne.s32.totalorder %s109, %s112
      %p121 = scmp.eq.s32.totalorder %s38, 1
      %p122 = por %p120, %p121
      %p123 = scmp.ne.s32.totalorder %s112, %s113
      %p124 = scmp.eq.s32.totalorder %s38, 0
      %p125 = por %p123, %p124
      %p126 = scmp.ne.s32.totalorder %s112, %s113
      %p127 = scmp.eq.s32.totalorder %s39, 1
      %p128 = por %p126, %p127
      %p130 = scmp.ne.s32.totalorder %s113, %s129
      %p131 = scmp.eq.s32.totalorder %s39, 0
      %p132 = por %p130, %p131
      %s134 = sadd.s32 %s133, 1
      %p137 = scmp.eq.s32.totalorder %s33, 1
      %p138 = scmp.ne.s32.totalorder %s133, %s135
      %p139 = scmp.eq.s32.totalorder %s33, 0
      %p140 = por %p138, %p139
      %p141 = scmp.ne.s32.totalorder %s133, %s135
      %p142 = scmp.eq.s32.totalorder %s38, 1
      %p143 = por %p141, %p142
      %p144 = scmp.ne.s32.totalorder %s135, %s136
      %p145 = scmp.eq.s32.totalorder %s38, 0
      %p146 = por %p144, %p145
      %p147 = scmp.ne.s32.totalorder %s135, %s136
      %p148 = scmp.eq.s32.totalorder %s39, 1
      %p149 = por %p147, %p148
      %p151 = scmp.ne.s32.totalorder %s136, %s150
      %p152 = scmp.eq.s32.totalorder %s39, 0
      %p153 = por %p151, %p152
      %s155 = sadd.s32 %s154, 1
      %p158 = scmp.eq.s32.totalorder %s33, 1
      %p159 = scmp.ne.s32.totalorder %s154, %s156
      %p160 = scmp.eq.s32.totalorder %s33, 0
      %p161 = por %p159, %p160
      %p162 = scmp.ne.s32.totalorder %s154, %s156
      %p163 = scmp.eq.s32.totalorder %s38, 1
      %p164 = por %p162, %p163
      %p165 = scmp.ne.s32.totalorder %s156, %s157
      %p166 = scmp.eq.s32.totalorder %s38, 0
      %p167 = por %p165, %p166
      %p168 = scmp.ne.s32.totalorder %s156, %s157
      %p169 = scmp.eq.s32.totalorder %s39, 1
      %p170 = por %p168, %p169
      %p172 = scmp.ne.s32.totalorder %s157, %s171
      %p173 = scmp.eq.s32.totalorder %s39, 0
      %p174 = por %p172, %p173
      %s176 = sadd.s32 %s175, 1
      %p179 = scmp.eq.s32.totalorder %s33, 1
      %p180 = scmp.ne.s32.totalorder %s175, %s177
      %p181 = scmp.eq.s32.totalorder %s33, 0
      %p182 = por %p180, %p181
      %p183 = scmp.ne.s32.totalorder %s175, %s177
      %p184 = scmp.eq.s32.totalorder %s38, 1
      %p185 = por %p183, %p184
      %p186 = scmp.ne.s32.totalorder %s177, %s178
      %p187 = scmp.eq.s32.totalorder %s38, 0
      %p188 = por %p186, %p187
      %p189 = scmp.ne.s32.totalorder %s177, %s178
      %p190 = scmp.eq.s32.totalorder %s39, 1
      %p191 = por %p189, %p190
      %p193 = scmp.ne.s32.totalorder %s178, %s192
      %p194 = scmp.eq.s32.totalorder %s39, 0
      %p195 = por %p193, %p194
      %s197 = sadd.s32 %s196, 1
      %p200 = scmp.eq.s32.totalorder %s33, 1
      %p201 = scmp.ne.s32.totalorder %s196, %s198
      %p202 = scmp.eq.s32.totalorder %s33, 0
      %p203 = por %p201, %p202
      %p204 = scmp.ne.s32.totalorder %s196, %s198
      %p205 = scmp.eq.s32.totalorder %s38, 1
      %p206 = por %p204, %p205
      %p207 = scmp.ne.s32.totalorder %s198, %s199
      %p208 = scmp.eq.s32.totalorder %s38, 0
      %p209 = por %p207, %p208
      %p210 = scmp.ne.s32.totalorder %s198, %s199
      %p211 = scmp.eq.s32.totalorder %s39, 1
      %p212 = por %p210, %p211
      %p214 = scmp.ne.s32.totalorder %s199, %s213
      %p215 = scmp.eq.s32.totalorder %s39, 0
      %p216 = por %p214, %p215
      %s218 = sadd.s32 %s217, 1
      %p221 = scmp.eq.s32.totalorder %s33, 1
      %p222 = scmp.ne.s32.totalorder %s217, %s219
      %p223 = scmp.eq.s32.totalorder %s33, 0
      %p224 = por %p222, %p223
      %p225 = scmp.ne.s32.totalorder %s217, %s219
      %p226 = scmp.eq.s32.totalorder %s38, 1
      %p227 = por %p225, %p226
      %p228 = scmp.ne.s32.totalorder %s219, %s220
      %p229 = scmp.eq.s32.totalorder %s38, 0
      %p230 = por %p228, %p229
      %p231 = scmp.ne.s32.totalorder %s219, %s220
      %p232 = scmp.eq.s32.totalorder %s39, 1
      %p233 = por %p231, %p232
      %p235 = scmp.ne.s32.totalorder %s220, %s234
      %p236 = scmp.eq.s32.totalorder %s39, 0
      %p237 = por %p235, %p236
      %s239 = sadd.s32 %s238, 1
      %p242 = scmp.eq.s32.totalorder %s33, 1
      %p243 = scmp.ne.s32.totalorder %s238, %s240
      %p244 = scmp.eq.s32.totalorder %s33, 0
      %p245 = por %p243, %p244
      %p246 = scmp.ne.s32.totalorder %s238, %s240
      %p247 = scmp.eq.s32.totalorder %s38, 1
      %p248 = por %p246, %p247
      %p249 = scmp.ne.s32.totalorder %s240, %s241
      %p250 = scmp.eq.s32.totalorder %s38, 0
      %p251 = por %p249, %p250
      %p252 = scmp.ne.s32.totalorder %s240, %s241
      %p253 = scmp.eq.s32.totalorder %s39, 1
      %p254 = por %p252, %p253
      %p256 = scmp.ne.s32.totalorder %s241, %s255
      %p257 = scmp.eq.s32.totalorder %s39, 0
      %p258 = por %p256, %p257
      %s260 = sadd.s32 %s259, 1
      %p263 = scmp.eq.s32.totalorder %s33, 1
      %p264 = scmp.ne.s32.totalorder %s259, %s261
      %p265 = scmp.eq.s32.totalorder %s33, 0
      %p266 = por %p264, %p265
      %p267 = scmp.ne.s32.totalorder %s259, %s261
      %p268 = scmp.eq.s32.totalorder %s38, 1
      %p269 = por %p267, %p268
      %p270 = scmp.ne.s32.totalorder %s261, %s262
      %p271 = scmp.eq.s32.totalorder %s38, 0
      %p272 = por %p270, %p271
      %p273 = scmp.ne.s32.totalorder %s261, %s262
      %p274 = scmp.eq.s32.totalorder %s39, 1
      %p275 = por %p273, %p274
      %p277 = scmp.ne.s32.totalorder %s262, %s276
      %p278 = scmp.eq.s32.totalorder %s39, 0
      %p279 = por %p277, %p278
      %s281 = sadd.s32 %s280, 1
      %p284 = scmp.eq.s32.totalorder %s33, 1
      %p285 = scmp.ne.s32.totalorder %s280, %s282
      %p286 = scmp.eq.s32.totalorder %s33, 0
      %p287 = por %p285, %p286
      %p288 = scmp.ne.s32.totalorder %s280, %s282
      %p289 = scmp.eq.s32.totalorder %s38, 1
      %p290 = por %p288, %p289
      %p291 = scmp.ne.s32.totalorder %s282, %s283
      %p292 = scmp.eq.s32.totalorder %s38, 0
      %p293 = por %p291, %p292
      %p294 = scmp.ne.s32.totalorder %s282, %s283
      %p295 = scmp.eq.s32.totalorder %s39, 1
      %p296 = por %p294, %p295
      %p298 = scmp.ne.s32.totalorder %s283, %s297
      %p299 = scmp.eq.s32.totalorder %s39, 0
      %p300 = por %p298, %p299
      %s302 = sadd.s32 %s301, 1
      %p305 = scmp.eq.s32.totalorder %s33, 1
      %p306 = scmp.ne.s32.totalorder %s301, %s303
      %p307 = scmp.eq.s32.totalorder %s33, 0
      %p308 = por %p306, %p307
      %p309 = scmp.ne.s32.totalorder %s301, %s303
      %p310 = scmp.eq.s32.totalorder %s38, 1
      %p311 = por %p309, %p310
      %p312 = scmp.ne.s32.totalorder %s303, %s304
      %p313 = scmp.eq.s32.totalorder %s38, 0
      %p314 = por %p312, %p313
      %p315 = scmp.ne.s32.totalorder %s303, %s304
      %p316 = scmp.eq.s32.totalorder %s39, 1
      %p317 = por %p315, %p316
      %p319 = scmp.ne.s32.totalorder %s304, %s318
      %p320 = scmp.eq.s32.totalorder %s39, 0
      %p321 = por %p319, %p320
      %s323 = sadd.s32 %s322, 1
      %p326 = scmp.eq.s32.totalorder %s33, 1
      %p327 = scmp.ne.s32.totalorder %s322, %s324
      %p328 = scmp.eq.s32.totalorder %s33, 0
      %p329 = por %p327, %p328
      %p330 = scmp.ne.s32.totalorder %s322, %s324
      %p331 = scmp.eq.s32.totalorder %s38, 1
      %p332 = por %p330, %p331
      %p333 = scmp.ne.s32.totalorder %s324, %s325
      %p334 = scmp.eq.s32.totalorder %s38, 0
      %p335 = por %p333, %p334
      %p336 = scmp.ne.s32.totalorder %s324, %s325
      %p337 = scmp.eq.s32.totalorder %s39, 1
      %p338 = por %p336, %p337
      %p340 = scmp.ne.s32.totalorder %s325, %s339
      %p341 = scmp.eq.s32.totalorder %s39, 0
      %p342 = por %p340, %p341
      %s343 = ssub.s32 %s40, %s52
      %s344 = ssub.s32 %s41, %s48
      %s345 = sor.u32 %s343, %s344
      %p346 = scmp.eq.s32.totalorder %s345, 0
      %s348 = sadd.s32 %s347, 1
      %s349 = scalar_select %p346, %s347, %s348
      %p352 = pneg %p346
      %p353 = scmp.eq.s32.totalorder %s33, 1
      %p354 = por %p352, %p353
      %p355 = scmp.ne.s32.totalorder %s347, %s350
      %p356 = scmp.eq.s32.totalorder %s33, 0
      %p357 = por %p355, %p356
      %p358 = scmp.ne.s32.totalorder %s347, %s350
      %p359 = scmp.eq.s32.totalorder %s38, 1
      %p360 = por %p358, %p359
      %p361 = scmp.ne.s32.totalorder %s350, %s351
      %p362 = scmp.eq.s32.totalorder %s38, 0
      %p363 = por %p361, %p362
      %p364 = scmp.ne.s32.totalorder %s350, %s351
      %p365 = scmp.eq.s32.totalorder %s39, 1
      %p366 = por %p364, %p365
      %p368 = scmp.ne.s32.totalorder %s351, %s367
      %p369 = scmp.eq.s32.totalorder %s39, 0
      %p370 = por %p368, %p369
      %p371 = scmp.le.s32.totalorder 1, %s33
      %p372 = scmp.lt.s32.totalorder %s33, 3
      %p373 = pnand %p371, %p372
      %p374 = pneg %p373
      // Predicated region
      $region9: #{tpu_custom_call.1} parent=5 // pred_check
        _
      $region10: #{tpu_custom_call.1} parent=5 // pred_check_branch
        %376 = sbr.rel (%p373) target = $region12
      $region11: #{tpu_custom_call.1} parent=5 // pred_region
        %s377 = ssub.s32 %s33, 1
        // Predicated region
        $region13: #{tpu_custom_call.1} parent=11 // pred_check
          %p378 = pneg %p146
        $region14: #{tpu_custom_call.1} parent=11 // pred_check_branch
          %380 = sbr.rel (%p378) target = $region16
        $region15: #{tpu_custom_call.1} parent=11 // pred_region
          %s382 = ssub.s32 512, 512
          %383 = vsyncadd [#allocation9], %s382
          %s384 = sshll.u32 [#allocation8], 4
          %s385 = int_to_ptr.vmem [resolvable:$true] %s384
          %390 = dma.hbm_to_vmem [thread:$0]  %s3, 512, %s385, [#allocation9], 128, 128, 8
        $region16: #{tpu_custom_call.1} parent=11 // pred_fallthru
          _
        // Predicated region
        $region17: #{tpu_custom_call.1} parent=11 // pred_check
          %p391 = pneg %p167
        $region18: #{tpu_custom_call.1} parent=11 // pred_check_branch
          %393 = sbr.rel (%p391) target = $region20
        $region19: #{tpu_custom_call.1} parent=11 // pred_region
          %s395 = ssub.s32 16, 16
          %396 = vsyncadd [#allocation9], %s395
          %s398 = sshll.u32 [#allocation10], 4
          %s399 = int_to_ptr.vmem [resolvable:$true] %s398
          %401 = dma.hbm_to_vmem [thread:$0]  %s4, 16, %s399, [#allocation9]
        $region20: #{tpu_custom_call.1} parent=11 // pred_fallthru
          _
        // Predicated region
        $region21: #{tpu_custom_call.1} parent=11 // pred_check
          %p402 = pneg %p188
        $region22: #{tpu_custom_call.1} parent=11 // pred_check_branch
          %404 = sbr.rel (%p402) target = $region24
        $region23: #{tpu_custom_call.1} parent=11 // pred_region
          %s406 = ssub.s32 512, 512
          %407 = vsyncadd [#allocation12], %s406
          %s408 = sshll.u32 [#allocation11], 4
          %s409 = int_to_ptr.vmem [resolvable:$true] %s408
          %414 = dma.hbm_to_vmem [thread:$0]  %s5, 512, %s409, [#allocation12], 128, 128, 8
        $region24: #{tpu_custom_call.1} parent=11 // pred_fallthru
          _
        // Predicated region
        $region25: #{tpu_custom_call.1} parent=11 // pred_check
          %p415 = pneg %p209
        $region26: #{tpu_custom_call.1} parent=11 // pred_check_branch
          %417 = sbr.rel (%p415) target = $region28
        $region27: #{tpu_custom_call.1} parent=11 // pred_region
          %s419 = ssub.s32 16, 16
          %420 = vsyncadd [#allocation12], %s419
          %s422 = sshll.u32 [#allocation13], 4
          %s423 = int_to_ptr.vmem [resolvable:$true] %s422
          %425 = dma.hbm_to_vmem [thread:$0]  %s6, 16, %s423, [#allocation12]
        $region28: #{tpu_custom_call.1} parent=11 // pred_fallthru
          _
        // Predicated region
        $region29: #{tpu_custom_call.1} parent=11 // pred_check
          %p426 = pneg %p230
        $region30: #{tpu_custom_call.1} parent=11 // pred_check_branch
          %428 = sbr.rel (%p426) target = $region32
        $region31: #{tpu_custom_call.1} parent=11 // pred_region
          %s430 = ssub.s32 512, 512
          %431 = vsyncadd [#allocation15], %s430
          %s432 = sshll.u32 [#allocation14], 4
          %s433 = int_to_ptr.vmem [resolvable:$true] %s432
          %438 = dma.hbm_to_vmem [thread:$0]  %s7, 512, %s433, [#allocation15], 128, 128, 8
        $region32: #{tpu_custom_call.1} parent=11 // pred_fallthru
          _
        // Predicated region
        $region33: #{tpu_custom_call.1} parent=11 // pred_check
          %p439 = pneg %p251
        $region34: #{tpu_custom_call.1} parent=11 // pred_check_branch
          %441 = sbr.rel (%p439) target = $region36
        $region35: #{tpu_custom_call.1} parent=11 // pred_region
          %s443 = ssub.s32 16, 16
          %444 = vsyncadd [#allocation15], %s443
          %s446 = sshll.u32 [#allocation16], 4
          %s447 = int_to_ptr.vmem [resolvable:$true] %s446
          %449 = dma.hbm_to_vmem [thread:$0]  %s8, 16, %s447, [#allocation15]
        $region36: #{tpu_custom_call.1} parent=11 // pred_fallthru
          _
        // Predicated region
        $region37: #{tpu_custom_call.1} parent=11 // pred_check
          %p450 = pneg %p272
        $region38: #{tpu_custom_call.1} parent=11 // pred_check_branch
          %452 = sbr.rel (%p450) target = $region40
        $region39: #{tpu_custom_call.1} parent=11 // pred_region
          %s454 = ssub.s32 512, 512
          %455 = vsyncadd [#allocation18], %s454
          %s456 = sshll.u32 [#allocation17], 4
          %s457 = int_to_ptr.vmem [resolvable:$true] %s456
          %462 = dma.hbm_to_vmem [thread:$0]  %s9, 512, %s457, [#allocation18], 128, 128, 8
        $region40: #{tpu_custom_call.1} parent=11 // pred_fallthru
          _
        // Predicated region
        $region41: #{tpu_custom_call.1} parent=11 // pred_check
          %p463 = pneg %p293
        $region42: #{tpu_custom_call.1} parent=11 // pred_check_branch
          %465 = sbr.rel (%p463) target = $region44
        $region43: #{tpu_custom_call.1} parent=11 // pred_region
          %s467 = ssub.s32 16, 16
          %468 = vsyncadd [#allocation18], %s467
          %s470 = sshll.u32 [#allocation19], 4
          %s471 = int_to_ptr.vmem [resolvable:$true] %s470
          %473 = dma.hbm_to_vmem [thread:$0]  %s10, 16, %s471, [#allocation18]
        $region44: #{tpu_custom_call.1} parent=11 // pred_fallthru
          _
        // Predicated region
        $region45: #{tpu_custom_call.1} parent=11 // pred_check
          %p474 = pneg %p314
        $region46: #{tpu_custom_call.1} parent=11 // pred_check_branch
          %476 = sbr.rel (%p474) target = $region48
        $region47: #{tpu_custom_call.1} parent=11 // pred_region
          %s478 = ssub.s32 16, 16
          %479 = vsyncadd [#allocation21], %s478
          %s481 = sshll.u32 [#allocation20], 4
          %s482 = int_to_ptr.vmem [resolvable:$true] %s481
          %484 = dma.hbm_to_vmem [thread:$0]  %s11, 16, %s482, [#allocation21]
        $region48: #{tpu_custom_call.1} parent=11 // pred_fallthru
          _
        // Predicated region
        $region49: #{tpu_custom_call.1} parent=11 // pred_check
          %p485 = pneg %p335
        $region50: #{tpu_custom_call.1} parent=11 // pred_check_branch
          %487 = sbr.rel (%p485) target = $region52
        $region51: #{tpu_custom_call.1} parent=11 // pred_region
          %s489 = ssub.s32 16, 16
          %490 = vsyncadd [#allocation21], %s489
          %s492 = sshll.u32 [#allocation22], 4
          %s493 = int_to_ptr.vmem [resolvable:$true] %s492
          %495 = dma.hbm_to_vmem [thread:$0]  %s12, 16, %s493, [#allocation21]
        $region52: #{tpu_custom_call.1} parent=11 // pred_fallthru
          _
      $region12: #{tpu_custom_call.1} parent=5 // pred_fallthru
        _
      %p496 = scmp.lt.s32.totalorder %s33, 2
      // Predicated region
      $region53: #{tpu_custom_call.1} parent=5 // pred_check
        %p497 = pneg %p496
      $region54: #{tpu_custom_call.1} parent=5 // pred_check_branch
        %499 = sbr.rel (%p497) target = $region56
      $region55: #{tpu_custom_call.1} parent=5 // pred_region
        // Predicated region
        $region57: #{tpu_custom_call.1} parent=55 // pred_check
          %p500 = pneg %p67
        $region58: #{tpu_custom_call.1} parent=55 // pred_check_branch
          %502 = sbr.rel (%p500) target = $region60
        $region59: #{tpu_custom_call.1} parent=55 // pred_region
          %s503 = sand.u32 %s57, 1
          %s504 = scalar_lea.sflag [#allocation3], %s503
          %s505 = sand.u32 %s57, 1
          %s506 = smul.addr %s505, 8
          %s507 = scalar_lea.vmem [#allocation2], %s506
          %s509 = ssub.s32 128, 128
          %510 = vsyncadd %s504, %s509
          %s511 = sadd.s32 %s41, %s40
          %s512 = smul.addr %s511, 128
          %s513 = scalar_lea.hbm %s0, %s512
          %s515 = sshll.u32 %s507, 4
          %s516 = int_to_ptr.vmem [resolvable:$true] %s515
          %518 = dma.hbm_to_vmem [thread:$0]  %s513, 128, %s516, %s504
        $region60: #{tpu_custom_call.1} parent=55 // pred_fallthru
          _
        // Predicated region
        $region61: #{tpu_custom_call.1} parent=55 // pred_check
          %p519 = pneg %p93
        $region62: #{tpu_custom_call.1} parent=55 // pred_check_branch
          %521 = sbr.rel (%p519) target = $region64
        $region63: #{tpu_custom_call.1} parent=55 // pred_region
          %s522 = sand.u32 %s33, 1
          %s523 = scalar_lea.sflag [#allocation6], %s522
          %s524 = sand.u32 %s83, 1
          %s525 = smul.addr %s524, 8
          %s526 = scalar_lea.vmem [#allocation5], %s525
          %s528 = ssub.s32 128, 128
          %529 = vsyncadd %s523, %s528
          %s530 = smul.addr %s40, 128
          %s531 = scalar_lea.hbm %s1, %s530
          %s533 = sshll.u32 %s526, 4
          %s534 = int_to_ptr.vmem [resolvable:$true] %s533
          %536 = dma.hbm_to_vmem [thread:$0]  %s531, 128, %s534, %s523
        $region64: #{tpu_custom_call.1} parent=55 // pred_fallthru
          _
        // Predicated region
        $region65: #{tpu_custom_call.1} parent=55 // pred_check
          %p537 = pneg %p119
        $region66: #{tpu_custom_call.1} parent=55 // pred_check_branch
          %539 = sbr.rel (%p537) target = $region68
        $region67: #{tpu_custom_call.1} parent=55 // pred_region
          %s540 = sand.u32 %s33, 1
          %s541 = scalar_lea.sflag [#allocation6], %s540
          %s542 = sand.u32 %s109, 1
          %s543 = scalar_lea.vmem [#allocation7], %s542
          %s545 = ssub.s32 16, 16
          %546 = vsyncadd %s541, %s545
          %s547 = smul.addr %s40, 16
          %s548 = scalar_lea.hbm %s2, %s547
          %s550 = sshll.u32 %s543, 4
          %s551 = int_to_ptr.vmem [resolvable:$true] %s550
          %553 = dma.hbm_to_vmem [thread:$0]  %s548, 16, %s551, %s541
        $region68: #{tpu_custom_call.1} parent=55 // pred_fallthru
          _
      $region56: #{tpu_custom_call.1} parent=5 // pred_fallthru
        _
      %p554 = scmp.le.s32.totalorder 1, %s33
      %p555 = scmp.lt.s32.totalorder %s33, 3
      %p556 = pnand %p554, %p555
      %p557 = pneg %p556
      // Predicated region
      $region69: #{tpu_custom_call.1} parent=5 // pred_check
        _
      $region70: #{tpu_custom_call.1} parent=5 // pred_check_branch
        %559 = sbr.rel (%p556) target = $region72
      $region71: #{tpu_custom_call.1} parent=5 // pred_region
        %s560 = ssub.s32 %s33, 1
        %s561 = sand.u32 %s60, 1
        %s562 = scalar_lea.sflag [#allocation3], %s561
        %s563 = sand.u32 %s60, 1
        %s564 = smul.addr %s563, 8
        %s565 = scalar_lea.vmem [#allocation2], %s564
        // Predicated region
        $region73: #{tpu_custom_call.1} parent=71 // pred_check
          %p566 = pneg %p73
        $region74: #{tpu_custom_call.1} parent=71 // pred_check_branch
          %568 = sbr.rel (%p566) target = $region76
        $region75: #{tpu_custom_call.1} parent=71 // pred_region
          %569 = dma.done %s562, 128
        $region76: #{tpu_custom_call.1} parent=71 // pred_fallthru
          _
        %s570 = sand.u32 %s38, 1
        %s571 = scalar_lea.sflag [#allocation6], %s570
        %s572 = sand.u32 %s86, 1
        %s573 = smul.addr %s572, 8
        %s574 = scalar_lea.vmem [#allocation5], %s573
        // Predicated region
        $region77: #{tpu_custom_call.1} parent=71 // pred_check
          %p575 = pneg %p99
        $region78: #{tpu_custom_call.1} parent=71 // pred_check_branch
          %577 = sbr.rel (%p575) target = $region80
        $region79: #{tpu_custom_call.1} parent=71 // pred_region
          %578 = dma.done %s571, 128
        $region80: #{tpu_custom_call.1} parent=71 // pred_fallthru
          _
        %s579 = sand.u32 %s38, 1
        %s580 = scalar_lea.sflag [#allocation6], %s579
        %s581 = sand.u32 %s112, 1
        %s582 = scalar_lea.vmem [#allocation7], %s581
        // Predicated region
        $region81: #{tpu_custom_call.1} parent=71 // pred_check
          %p583 = pneg %p125
        $region82: #{tpu_custom_call.1} parent=71 // pred_check_branch
          %585 = sbr.rel (%p583) target = $region84
        $region83: #{tpu_custom_call.1} parent=71 // pred_region
          %586 = dma.done %s580, 16
        $region84: #{tpu_custom_call.1} parent=71 // pred_fallthru
          _
        // Predicated region
        $region85: #{tpu_custom_call.1} parent=71 // pred_check
          %p587 = pneg %p146
        $region86: #{tpu_custom_call.1} parent=71 // pred_check_branch
          %589 = sbr.rel (%p587) target = $region88
        $region87: #{tpu_custom_call.1} parent=71 // pred_region
          %590 = dma.done [#allocation9], 512
        $region88: #{tpu_custom_call.1} parent=71 // pred_fallthru
          _
        // Predicated region
        $region89: #{tpu_custom_call.1} parent=71 // pred_check
          %p591 = pneg %p167
        $region90: #{tpu_custom_call.1} parent=71 // pred_check_branch
          %593 = sbr.rel (%p591) target = $region92
        $region91: #{tpu_custom_call.1} parent=71 // pred_region
          %594 = dma.done [#allocation9], 16
        $region92: #{tpu_custom_call.1} parent=71 // pred_fallthru
          _
        // Predicated region
        $region93: #{tpu_custom_call.1} parent=71 // pred_check
          %p595 = pneg %p188
        $region94: #{tpu_custom_call.1} parent=71 // pred_check_branch
          %597 = sbr.rel (%p595) target = $region96
        $region95: #{tpu_custom_call.1} parent=71 // pred_region
          %598 = dma.done [#allocation12], 512
        $region96: #{tpu_custom_call.1} parent=71 // pred_fallthru
          _
        // Predicated region
        $region97: #{tpu_custom_call.1} parent=71 // pred_check
          %p599 = pneg %p209
        $region98: #{tpu_custom_call.1} parent=71 // pred_check_branch
          %601 = sbr.rel (%p599) target = $region100
        $region99: #{tpu_custom_call.1} parent=71 // pred_region
          %602 = dma.done [#allocation12], 16
        $region100: #{tpu_custom_call.1} parent=71 // pred_fallthru
          _
        // Predicated region
        $region101: #{tpu_custom_call.1} parent=71 // pred_check
          %p603 = pneg %p230
        $region102: #{tpu_custom_call.1} parent=71 // pred_check_branch
          %605 = sbr.rel (%p603) target = $region104
        $region103: #{tpu_custom_call.1} parent=71 // pred_region
          %606 = dma.done [#allocation15], 512
        $region104: #{tpu_custom_call.1} parent=71 // pred_fallthru
          _
        // Predicated region
        $region105: #{tpu_custom_call.1} parent=71 // pred_check
          %p607 = pneg %p251
        $region106: #{tpu_custom_call.1} parent=71 // pred_check_branch
          %609 = sbr.rel (%p607) target = $region108
        $region107: #{tpu_custom_call.1} parent=71 // pred_region
          %610 = dma.done [#allocation15], 16
        $region108: #{tpu_custom_call.1} parent=71 // pred_fallthru
          _
        // Predicated region
        $region109: #{tpu_custom_call.1} parent=71 // pred_check
          %p611 = pneg %p272
        $region110: #{tpu_custom_call.1} parent=71 // pred_check_branch
          %613 = sbr.rel (%p611) target = $region112
        $region111: #{tpu_custom_call.1} parent=71 // pred_region
          %614 = dma.done [#allocation18], 512
        $region112: #{tpu_custom_call.1} parent=71 // pred_fallthru
          _
        // Predicated region
        $region113: #{tpu_custom_call.1} parent=71 // pred_check
          %p615 = pneg %p293
        $region114: #{tpu_custom_call.1} parent=71 // pred_check_branch
          %617 = sbr.rel (%p615) target = $region116
        $region115: #{tpu_custom_call.1} parent=71 // pred_region
          %618 = dma.done [#allocation18], 16
        $region116: #{tpu_custom_call.1} parent=71 // pred_fallthru
          _
        // Predicated region
        $region117: #{tpu_custom_call.1} parent=71 // pred_check
          %p619 = pneg %p314
        $region118: #{tpu_custom_call.1} parent=71 // pred_check_branch
          %621 = sbr.rel (%p619) target = $region120
        $region119: #{tpu_custom_call.1} parent=71 // pred_region
          %622 = dma.done [#allocation21], 16
        $region120: #{tpu_custom_call.1} parent=71 // pred_fallthru
          _
        // Predicated region
        $region121: #{tpu_custom_call.1} parent=71 // pred_check
          %p623 = pneg %p335
        $region122: #{tpu_custom_call.1} parent=71 // pred_check_branch
          %625 = sbr.rel (%p623) target = $region124
        $region123: #{tpu_custom_call.1} parent=71 // pred_region
          %626 = dma.done [#allocation21], 16
        $region124: #{tpu_custom_call.1} parent=71 // pred_fallthru
          _
        %s627 = sand.u32 %s60, 1
        %s628 = scalar_lea.sflag [#allocation3], %s627
        %s629 = sand.u32 %s60, 1
        %s630 = smul.addr %s629, 8
        %s631 = scalar_lea.vmem [#allocation2], %s630
        %p632 = pneg %p73
        %p633 = pneg %p70
        %s634 = sand.u32 %s38, 1
        %s635 = scalar_lea.sflag [#allocation6], %s634
        %s636 = sand.u32 %s86, 1
        %s637 = smul.addr %s636, 8
        %s638 = scalar_lea.vmem [#allocation5], %s637
        %p639 = pneg %p99
        %p640 = pneg %p96
        %s641 = sand.u32 %s38, 1
        %s642 = scalar_lea.sflag [#allocation6], %s641
        %s643 = sand.u32 %s112, 1
        %s644 = scalar_lea.vmem [#allocation7], %s643
        %p645 = pneg %p125
        %p646 = pneg %p122
        %p647 = pneg %p146
        %p648 = pneg %p143
        %p649 = pneg %p167
        %p650 = pneg %p164
        %p651 = pneg %p188
        %p652 = pneg %p185
        %p653 = pneg %p209
        %p654 = pneg %p206
        %p655 = pneg %p230
        %p656 = pneg %p227
        %p657 = pneg %p251
        %p658 = pneg %p248
        %p659 = pneg %p272
        %p660 = pneg %p269
        %p661 = pneg %p293
        %p662 = pneg %p290
        %p663 = pneg %p314
        %p664 = pneg %p311
        %p665 = pneg %p335
        %p666 = pneg %p332
        %p667 = pneg %p363
        %p668 = pneg %p360
        %s669 = sand.u32 %s350, 1
        %s670 = scalar_lea.sflag [#allocation4], %s669
        %s671 = sand.u32 %s350, 1
        %s672 = smul.addr %s671, 8
        %s673 = scalar_lea.vmem [#allocation23], %s672
        %v674 = vld [vmem:[%s565] sm:$0xff]
        %v675 = vld [vmem:[%s574] sm:$0xff]
        %v676 = vld [vmem:[%s582] sm:$0x1]
        %v677 = vld [vmem:[#allocation8] sm:$0xff]
        %v678 = vld [vmem:[#allocation8 + $0x8] sm:$0xff]
        %v679 = vld [vmem:[#allocation8 + $0x10] sm:$0xff]
        %v680 = vld [vmem:[#allocation8 + $0x18] sm:$0xff]
        %v681 = vld [vmem:[#allocation10] sm:$0x1]
        %v683 = vlaneseq
        %v684 = vshrl.u32 %v683, 7
        %v685 = vsub.s32 0, %v684
        %v686 = vrot.slane %v681, %v685
        %vm688 = vcmask 261120
        %v690 = vsel %vm688, %v674, 0
        %692 = vmatprep.subr.mxu0 0.0
        %693 = vmatpush1.msra.mxu0 %v677
        %694 = vmatprep.subr.mxu0 0.0
        %695 = vmatpush1.msra.mxu0 %v678
        %696 = vmatprep.subr.mxu0 0.0
        %697 = vmatpush1.msra.mxu0 %v679
        %698 = vmatprep.subr.mxu0 0.0
        %699 = vmatpush1.msra.mxu0 %v680
        %700 = vmatprep.subr.mxu0 0.0
        %701 = vmatpush1.msra.mxu0 0.0
        %702 = vmatprep.subr.mxu0 0.0
        %703 = vmatpush1.msra.mxu0 0.0
        %704 = vmatprep.subr.mxu0 0.0
        %705 = vmatpush1.msra.mxu0 0.0
        %706 = vmatprep.subr.mxu0 0.0
        %707 = vmatpush1.msra.mxu0 0.0
        %708 = vmatprep.subr.mxu0 0.0
        %709 = vmatpush1.msra.mxu0 0.0
        %710 = vmatprep.subr.mxu0 0.0
        %711 = vmatpush1.msra.mxu0 0.0
        %712 = vmatprep.subr.mxu0 0.0
        %713 = vmatpush1.msra.mxu0 0.0
        %714 = vmatprep.subr.mxu0 0.0
        %715 = vmatpush1.msra.mxu0 0.0
        %716 = vmatprep.subr.mxu0 0.0
        %717 = vmatpush1.msra.mxu0 0.0
        %718 = vmatprep.subr.mxu0 0.0
        %719 = vmatpush1.msra.mxu0 0.0
        %720 = vmatprep.subr.mxu0 0.0
        %721 = vmatpush1.msra.mxu0 0.0
        %722 = vmatprep.subr.mxu0 0.0
        %723 = vmatpush1.msra.mxu0 0.0
        %724 = vmatprep.subr.mxu0 0.0
        %725 = vmatpush1.msra.mxu0 0.0
        %726 = vmatprep.subr.mxu0 0.0
        %727 = vmatpush1.msra.mxu0 0.0
        %728 = vmatprep.subr.mxu0 0.0
        %729 = vmatpush1.msra.mxu0 0.0
        %730 = vmatprep.subr.mxu0 0.0
        %731 = vmatpush1.msra.mxu0 0.0
        %732 = vmatprep.subr.mxu0 0.0
        %733 = vmatpush1.msra.mxu0 0.0
        %734 = vmatprep.subr.mxu0 0.0
        %735 = vmatpush1.msra.mxu0 0.0
        %736 = vmatprep.subr.mxu0 0.0
        %737 = vmatpush1.msra.mxu0 0.0
        %738 = vmatprep.subr.mxu0 0.0
        %739 = vmatpush1.msra.mxu0 0.0
        %740 = vmatprep.subr.mxu0 0.0
        %741 = vmatpush1.msra.mxu0 0.0
        %742 = vmatprep.subr.mxu0 0.0
        %743 = vmatpush1.msra.mxu0 0.0
        %744 = vmatprep.subr.mxu0 0.0
        %745 = vmatpush1.msra.mxu0 0.0
        %746 = vmatprep.subr.mxu0 0.0
        %747 = vmatpush1.msra.mxu0 0.0
        %748 = vmatprep.subr.mxu0 0.0
        %749 = vmatpush1.msra.mxu0 0.0
        %750 = vmatprep.subr.mxu0 0.0
        %751 = vmatpush1.msra.mxu0 0.0
        %752 = vmatprep.subr.mxu0 0.0
        %753 = vmatpush1.msra.mxu0 0.0
        %754 = vmatprep.subr.mxu0 0.0
        %755 = vmatpush1.msra.mxu0 0.0
        %756 = vmatprep.mubr.f32.mxu0 0.0
        %757 = vmatmul.mubr.f32.gmra.mrb[0].mxu0 %v690
        %v758 = vpop.f32.mrb[0].mxu0
        %v759 = vadd.f32 %v686, %v758
        %v760 = vpop.f32.mrb[0].mxu0
        %761 = vdwg.mxu0
        %v762 = vld [vmem:[#allocation11] sm:$0xff]
        %v763 = vld [vmem:[#allocation11 + $0x8] sm:$0xff]
        %v764 = vld [vmem:[#allocation11 + $0x10] sm:$0xff]
        %v765 = vld [vmem:[#allocation11 + $0x18] sm:$0xff]
        %v766 = vld [vmem:[#allocation13] sm:$0x1]
        %v768 = vlaneseq
        %v769 = vshrl.u32 %v768, 7
        %v770 = vsub.s32 0, %v769
        %v771 = vrot.slane %v766, %v770
        %v774 = vsel %vm688, %v675, 0
        %776 = vmatprep.subr.mxu0 0.0
        %777 = vmatpush1.msra.mxu0 %v762
        %778 = vmatprep.subr.mxu0 0.0
        %779 = vmatpush1.msra.mxu0 %v763
        %780 = vmatprep.subr.mxu0 0.0
        %781 = vmatpush1.msra.mxu0 %v764
        %782 = vmatprep.subr.mxu0 0.0
        %783 = vmatpush1.msra.mxu0 %v765
        %784 = vmatprep.subr.mxu0 0.0
        %785 = vmatpush1.msra.mxu0 0.0
        %786 = vmatprep.subr.mxu0 0.0
        %787 = vmatpush1.msra.mxu0 0.0
        %788 = vmatprep.subr.mxu0 0.0
        %789 = vmatpush1.msra.mxu0 0.0
        %790 = vmatprep.subr.mxu0 0.0
        %791 = vmatpush1.msra.mxu0 0.0
        %792 = vmatprep.subr.mxu0 0.0
        %793 = vmatpush1.msra.mxu0 0.0
        %794 = vmatprep.subr.mxu0 0.0
        %795 = vmatpush1.msra.mxu0 0.0
        %796 = vmatprep.subr.mxu0 0.0
        %797 = vmatpush1.msra.mxu0 0.0
        %798 = vmatprep.subr.mxu0 0.0
        %799 = vmatpush1.msra.mxu0 0.0
        %800 = vmatprep.subr.mxu0 0.0
        %801 = vmatpush1.msra.mxu0 0.0
        %802 = vmatprep.subr.mxu0 0.0
        %803 = vmatpush1.msra.mxu0 0.0
        %804 = vmatprep.subr.mxu0 0.0
        %805 = vmatpush1.msra.mxu0 0.0
        %806 = vmatprep.subr.mxu0 0.0
        %807 = vmatpush1.msra.mxu0 0.0
        %808 = vmatprep.subr.mxu0 0.0
        %809 = vmatpush1.msra.mxu0 0.0
        %810 = vmatprep.subr.mxu0 0.0
        %811 = vmatpush1.msra.mxu0 0.0
        %812 = vmatprep.subr.mxu0 0.0
        %813 = vmatpush1.msra.mxu0 0.0
        %814 = vmatprep.subr.mxu0 0.0
        %815 = vmatpush1.msra.mxu0 0.0
        %816 = vmatprep.subr.mxu0 0.0
        %817 = vmatpush1.msra.mxu0 0.0
        %818 = vmatprep.subr.mxu0 0.0
        %819 = vmatpush1.msra.mxu0 0.0
        %820 = vmatprep.subr.mxu0 0.0
        %821 = vmatpush1.msra.mxu0 0.0
        %822 = vmatprep.subr.mxu0 0.0
        %823 = vmatpush1.msra.mxu0 0.0
        %824 = vmatprep.subr.mxu0 0.0
        %825 = vmatpush1.msra.mxu0 0.0
        %826 = vmatprep.subr.mxu0 0.0
        %827 = vmatpush1.msra.mxu0 0.0
        %828 = vmatprep.subr.mxu0 0.0
        %829 = vmatpush1.msra.mxu0 0.0
        %830 = vmatprep.subr.mxu0 0.0
        %831 = vmatpush1.msra.mxu0 0.0
        %832 = vmatprep.subr.mxu0 0.0
        %833 = vmatpush1.msra.mxu0 0.0
        %834 = vmatprep.subr.mxu0 0.0
        %835 = vmatpush1.msra.mxu0 0.0
        %836 = vmatprep.subr.mxu0 0.0
        %837 = vmatpush1.msra.mxu0 0.0
        %838 = vmatprep.subr.mxu0 0.0
        %839 = vmatpush1.msra.mxu0 0.0
        %840 = vmatprep.mubr.f32.mxu0 0.0
        %841 = vmatmul.mubr.f32.gmra.mrb[0].mxu0 %v774
        %v842 = vpop.f32.mrb[0].mxu0
        %v843 = vadd.f32 %v771, %v842
        %v844 = vpop.f32.mrb[0].mxu0
        %845 = vdwg.mxu0
        %v846 = vld [vmem:[#allocation14] sm:$0xff]
        %v847 = vld [vmem:[#allocation14 + $0x8] sm:$0xff]
        %v848 = vld [vmem:[#allocation14 + $0x10] sm:$0xff]
        %v849 = vld [vmem:[#allocation14 + $0x18] sm:$0xff]
        %v850 = vld [vmem:[#allocation16] sm:$0x1]
        %v852 = vlaneseq
        %v853 = vshrl.u32 %v852, 7
        %v854 = vsub.s32 0, %v853
        %v855 = vrot.slane %v850, %v854
        %857 = vmatprep.subr.mxu0 0.0
        %858 = vmatpush1.msra.mxu0 %v846
        %859 = vmatprep.subr.mxu0 0.0
        %860 = vmatpush1.msra.mxu0 %v847
        %861 = vmatprep.subr.mxu0 0.0
        %862 = vmatpush1.msra.mxu0 %v848
        %863 = vmatprep.subr.mxu0 0.0
        %864 = vmatpush1.msra.mxu0 %v849
        %865 = vmatprep.subr.mxu0 0.0
        %866 = vmatpush1.msra.mxu0 0.0
        %867 = vmatprep.subr.mxu0 0.0
        %868 = vmatpush1.msra.mxu0 0.0
        %869 = vmatprep.subr.mxu0 0.0
        %870 = vmatpush1.msra.mxu0 0.0
        %871 = vmatprep.subr.mxu0 0.0
        %872 = vmatpush1.msra.mxu0 0.0
        %873 = vmatprep.subr.mxu0 0.0
        %874 = vmatpush1.msra.mxu0 0.0
        %875 = vmatprep.subr.mxu0 0.0
        %876 = vmatpush1.msra.mxu0 0.0
        %877 = vmatprep.subr.mxu0 0.0
        %878 = vmatpush1.msra.mxu0 0.0
        %879 = vmatprep.subr.mxu0 0.0
        %880 = vmatpush1.msra.mxu0 0.0
        %881 = vmatprep.subr.mxu0 0.0
        %882 = vmatpush1.msra.mxu0 0.0
        %883 = vmatprep.subr.mxu0 0.0
        %884 = vmatpush1.msra.mxu0 0.0
        %885 = vmatprep.subr.mxu0 0.0
        %886 = vmatpush1.msra.mxu0 0.0
        %887 = vmatprep.subr.mxu0 0.0
        %888 = vmatpush1.msra.mxu0 0.0
        %889 = vmatprep.subr.mxu0 0.0
        %890 = vmatpush1.msra.mxu0 0.0
        %891 = vmatprep.subr.mxu0 0.0
        %892 = vmatpush1.msra.mxu0 0.0
        %893 = vmatprep.subr.mxu0 0.0
        %894 = vmatpush1.msra.mxu0 0.0
        %895 = vmatprep.subr.mxu0 0.0
        %896 = vmatpush1.msra.mxu0 0.0
        %897 = vmatprep.subr.mxu0 0.0
        %898 = vmatpush1.msra.mxu0 0.0
        %899 = vmatprep.subr.mxu0 0.0
        %900 = vmatpush1.msra.mxu0 0.0
        %901 = vmatprep.subr.mxu0 0.0
        %902 = vmatpush1.msra.mxu0 0.0
        %903 = vmatprep.subr.mxu0 0.0
        %904 = vmatpush1.msra.mxu0 0.0
        %905 = vmatprep.subr.mxu0 0.0
        %906 = vmatpush1.msra.mxu0 0.0
        %907 = vmatprep.subr.mxu0 0.0
        %908 = vmatpush1.msra.mxu0 0.0
        %909 = vmatprep.subr.mxu0 0.0
        %910 = vmatpush1.msra.mxu0 0.0
        %911 = vmatprep.subr.mxu0 0.0
        %912 = vmatpush1.msra.mxu0 0.0
        %913 = vmatprep.subr.mxu0 0.0
        %914 = vmatpush1.msra.mxu0 0.0
        %915 = vmatprep.subr.mxu0 0.0
        %916 = vmatpush1.msra.mxu0 0.0
        %917 = vmatprep.subr.mxu0 0.0
        %918 = vmatpush1.msra.mxu0 0.0
        %919 = vmatprep.subr.mxu0 0.0
        %920 = vmatpush1.msra.mxu0 0.0
        %921 = vmatprep.mubr.f32.mxu0 0.0
        %922 = vmatmul.mubr.f32.gmra.mrb[0].mxu0 %v774
        %v923 = vpop.f32.mrb[0].mxu0
        %v924 = vadd.f32 %v855, %v923
        %v925 = vpop.f32.mrb[0].mxu0
        %926 = vdwg.mxu0
        %v927 = vmul.f32 %v759, 0.35355338
        %929 = vrot.lane.b32.xlu0 %v927, 120
        %v930 = vpop.permute.xlu0 %929
        %932 = vrot.lane.b32.xlu0 %v927, 112
        %v933 = vpop.permute.xlu0 %932
        %935 = vrot.lane.b32.xlu0 %v927, 104
        %v936 = vpop.permute.xlu0 %935
        %v938 = vcombine.low %v927, %v933
        %v939 = vcombine.high %v927, %v933
        %v941 = vunpack.c.l.s4 1983009808
        %v942 = vunpack.c.0.s8 %v941
        %v943 = vlaneseq
        %v944 = vshrl.u32 %v943, 7
        %v945 = vsub.s32 %v942, %v944
        %v946 = vrot.slane %v938, %v945
        %v948 = vunpack.c.l.s4 1983009808
        %v949 = vunpack.c.0.s8 %v948
        %v950 = vlaneseq
        %v951 = vshrl.u32 %v950, 7
        %v952 = vsub.s32 %v949, %v951
        %v953 = vrot.slane %v939, %v952
        %v954 = vcombine.low %v930, %v936
        %v955 = vcombine.high %v930, %v936
        %v957 = vunpack.c.l.s4 1983009808
        %v958 = vunpack.c.0.s8 %v957
        %v959 = vlaneseq
        %v960 = vshrl.u32 %v959, 7
        %v961 = vsub.s32 %v958, %v960
        %v962 = vrot.slane %v954, %v961
        %v964 = vunpack.c.l.s4 1983009808
        %v965 = vunpack.c.0.s8 %v964
        %v966 = vlaneseq
        %v967 = vshrl.u32 %v966, 7
        %v968 = vsub.s32 %v965, %v967
        %v969 = vrot.slane %v955, %v968
        %v970 = vcombine.low %v946, %v962
        %v971 = vcombine.high %v946, %v962
        %v973 = vunpack.c.l.s4 1934713408
        %v974 = vunpack.c.0.s8 %v973
        %v975 = vlaneseq
        %v976 = vshrl.u32 %v975, 7
        %v977 = vsub.s32 %v974, %v976
        %v978 = vrot.slane %v970, %v977
        %v980 = vunpack.c.l.s4 1934713408
        %v981 = vunpack.c.0.s8 %v980
        %v982 = vlaneseq
        %v983 = vshrl.u32 %v982, 7
        %v984 = vsub.s32 %v981, %v983
        %v985 = vrot.slane %v971, %v984
        %v986 = vcombine.low %v953, %v969
        %v987 = vcombine.high %v953, %v969
        %v989 = vunpack.c.l.s4 1934713408
        %v990 = vunpack.c.0.s8 %v989
        %v991 = vlaneseq
        %v992 = vshrl.u32 %v991, 7
        %v993 = vsub.s32 %v990, %v992
        %v994 = vrot.slane %v986, %v993
        %v996 = vunpack.c.l.s4 1934713408
        %v997 = vunpack.c.0.s8 %v996
        %v998 = vlaneseq
        %v999 = vshrl.u32 %v998, 7
        %v1000 = vsub.s32 %v997, %v999
        %v1001 = vrot.slane %v987, %v1000
        %v1002 = vcombine.high %v978, 0.0
        %v1003 = vcombine.high %v985, 0.0
        %v1004 = vcombine.high %v994, 0.0
        %v1005 = vcombine.high %v1001, 0.0
        %v1006 = vcombine.low %v978, %v985
        %v1008 = vunpack.c.l.s4 1983009808
        %v1009 = vunpack.c.0.s8 %v1008
        %v1010 = vlaneseq
        %v1011 = vshrl.u32 %v1010, 7
        %v1012 = vsub.s32 %v1009, %v1011
        %v1013 = vrot.slane %v1006, %v1012
        %v1014 = vcombine.low %v1002, %v1003
        %v1016 = vunpack.c.l.s4 1983009808
        %v1017 = vunpack.c.0.s8 %v1016
        %v1018 = vlaneseq
        %v1019 = vshrl.u32 %v1018, 7
        %v1020 = vsub.s32 %v1017, %v1019
        %v1021 = vrot.slane %v1014, %v1020
        %v1022 = vcombine.low %v994, %v1001
        %v1024 = vunpack.c.l.s4 1983009808
        %v1025 = vunpack.c.0.s8 %v1024
        %v1026 = vlaneseq
        %v1027 = vshrl.u32 %v1026, 7
        %v1028 = vsub.s32 %v1025, %v1027
        %v1029 = vrot.slane %v1022, %v1028
        %v1030 = vcombine.low %v1004, %v1005
        %v1032 = vunpack.c.l.s4 1983009808
        %v1033 = vunpack.c.0.s8 %v1032
        %v1034 = vlaneseq
        %v1035 = vshrl.u32 %v1034, 7
        %v1036 = vsub.s32 %v1033, %v1035
        %v1037 = vrot.slane %v1030, %v1036
        %v1038 = vcombine.low %v1013, %v1021
        %v1039 = vcombine.high %v1013, %v1021
        %v1041 = vunpack.c.l.s4 1934713408
        %v1042 = vunpack.c.0.s8 %v1041
        %v1043 = vlaneseq
        %v1044 = vshrl.u32 %v1043, 7
        %v1045 = vsub.s32 %v1042, %v1044
        %v1046 = vrot.slane %v1038, %v1045
        %v1048 = vunpack.c.l.s4 1934713408
        %v1049 = vunpack.c.0.s8 %v1048
        %v1050 = vlaneseq
        %v1051 = vshrl.u32 %v1050, 7
        %v1052 = vsub.s32 %v1049, %v1051
        %v1053 = vrot.slane %v1039, %v1052
        %v1054 = vcombine.low %v1029, %v1037
        %v1055 = vcombine.high %v1029, %v1037
        %v1057 = vunpack.c.l.s4 1934713408
        %v1058 = vunpack.c.0.s8 %v1057
        %v1059 = vlaneseq
        %v1060 = vshrl.u32 %v1059, 7
        %v1061 = vsub.s32 %v1058, %v1060
        %v1062 = vrot.slane %v1054, %v1061
        %v1064 = vunpack.c.l.s4 1934713408
        %v1065 = vunpack.c.0.s8 %v1064
        %v1066 = vlaneseq
        %v1067 = vshrl.u32 %v1066, 7
        %v1068 = vsub.s32 %v1065, %v1067
        %v1069 = vrot.slane %v1055, %v1068
        %v1070 = vcombine.low %v1046, %v1062
        %v1071 = vcombine.high %v1046, %v1062
        %v1072 = vcombine.low %v1053, %v1069
        %v1073 = vcombine.high %v1053, %v1069
        %1075 = vrot.lane.b32.xlu0 %v843, 120
        %v1076 = vpop.permute.xlu0 %1075
        %1078 = vrot.lane.b32.xlu0 %v843, 112
        %v1079 = vpop.permute.xlu0 %1078
        %1081 = vrot.lane.b32.xlu0 %v843, 104
        %v1082 = vpop.permute.xlu0 %1081
        %v1084 = vcombine.low %v843, %v1079
        %v1085 = vcombine.high %v843, %v1079
        %v1087 = vunpack.c.l.s4 1983009808
        %v1088 = vunpack.c.0.s8 %v1087
        %v1089 = vlaneseq
        %v1090 = vshrl.u32 %v1089, 7
        %v1091 = vsub.s32 %v1088, %v1090
        %v1092 = vrot.slane %v1084, %v1091
        %v1094 = vunpack.c.l.s4 1983009808
        %v1095 = vunpack.c.0.s8 %v1094
        %v1096 = vlaneseq
        %v1097 = vshrl.u32 %v1096, 7
        %v1098 = vsub.s32 %v1095, %v1097
        %v1099 = vrot.slane %v1085, %v1098
        %v1100 = vcombine.low %v1076, %v1082
        %v1101 = vcombine.high %v1076, %v1082
        %v1103 = vunpack.c.l.s4 1983009808
        %v1104 = vunpack.c.0.s8 %v1103
        %v1105 = vlaneseq
        %v1106 = vshrl.u32 %v1105, 7
        %v1107 = vsub.s32 %v1104, %v1106
        %v1108 = vrot.slane %v1100, %v1107
        %v1110 = vunpack.c.l.s4 1983009808
        %v1111 = vunpack.c.0.s8 %v1110
        %v1112 = vlaneseq
        %v1113 = vshrl.u32 %v1112, 7
        %v1114 = vsub.s32 %v1111, %v1113
        %v1115 = vrot.slane %v1101, %v1114
        %v1116 = vcombine.low %v1092, %v1108
        %v1117 = vcombine.high %v1092, %v1108
        %v1119 = vunpack.c.l.s4 1934713408
        %v1120 = vunpack.c.0.s8 %v1119
        %v1121 = vlaneseq
        %v1122 = vshrl.u32 %v1121, 7
        %v1123 = vsub.s32 %v1120, %v1122
        %v1124 = vrot.slane %v1116, %v1123
        %v1126 = vunpack.c.l.s4 1934713408
        %v1127 = vunpack.c.0.s8 %v1126
        %v1128 = vlaneseq
        %v1129 = vshrl.u32 %v1128, 7
        %v1130 = vsub.s32 %v1127, %v1129
        %v1131 = vrot.slane %v1117, %v1130
        %v1132 = vcombine.low %v1099, %v1115
        %v1133 = vcombine.high %v1099, %v1115
        %v1135 = vunpack.c.l.s4 1934713408
        %v1136 = vunpack.c.0.s8 %v1135
        %v1137 = vlaneseq
        %v1138 = vshrl.u32 %v1137, 7
        %v1139 = vsub.s32 %v1136, %v1138
        %v1140 = vrot.slane %v1132, %v1139
        %v1142 = vunpack.c.l.s4 1934713408
        %v1143 = vunpack.c.0.s8 %v1142
        %v1144 = vlaneseq
        %v1145 = vshrl.u32 %v1144, 7
        %v1146 = vsub.s32 %v1143, %v1145
        %v1147 = vrot.slane %v1133, %v1146
        %v1148 = vcombine.high %v1124, 0.0
        %v1149 = vcombine.high %v1131, 0.0
        %v1150 = vcombine.high %v1140, 0.0
        %v1151 = vcombine.high %v1147, 0.0
        %v1152 = vcombine.low %v1124, %v1131
        %v1154 = vunpack.c.l.s4 1983009808
        %v1155 = vunpack.c.0.s8 %v1154
        %v1156 = vlaneseq
        %v1157 = vshrl.u32 %v1156, 7
        %v1158 = vsub.s32 %v1155, %v1157
        %v1159 = vrot.slane %v1152, %v1158
        %v1160 = vcombine.low %v1148, %v1149
        %v1162 = vunpack.c.l.s4 1983009808
        %v1163 = vunpack.c.0.s8 %v1162
        %v1164 = vlaneseq
        %v1165 = vshrl.u32 %v1164, 7
        %v1166 = vsub.s32 %v1163, %v1165
        %v1167 = vrot.slane %v1160, %v1166
        %v1168 = vcombine.low %v1140, %v1147
        %v1170 = vunpack.c.l.s4 1983009808
        %v1171 = vunpack.c.0.s8 %v1170
        %v1172 = vlaneseq
        %v1173 = vshrl.u32 %v1172, 7
        %v1174 = vsub.s32 %v1171, %v1173
        %v1175 = vrot.slane %v1168, %v1174
        %v1176 = vcombine.low %v1150, %v1151
        %v1178 = vunpack.c.l.s4 1983009808
        %v1179 = vunpack.c.0.s8 %v1178
        %v1180 = vlaneseq
        %v1181 = vshrl.u32 %v1180, 7
        %v1182 = vsub.s32 %v1179, %v1181
        %v1183 = vrot.slane %v1176, %v1182
        %v1184 = vcombine.low %v1159, %v1167
        %v1185 = vcombine.high %v1159, %v1167
        %v1187 = vunpack.c.l.s4 1934713408
        %v1188 = vunpack.c.0.s8 %v1187
        %v1189 = vlaneseq
        %v1190 = vshrl.u32 %v1189, 7
        %v1191 = vsub.s32 %v1188, %v1190
        %v1192 = vrot.slane %v1184, %v1191
        %v1194 = vunpack.c.l.s4 1934713408
        %v1195 = vunpack.c.0.s8 %v1194
        %v1196 = vlaneseq
        %v1197 = vshrl.u32 %v1196, 7
        %v1198 = vsub.s32 %v1195, %v1197
        %v1199 = vrot.slane %v1185, %v1198
        %v1200 = vcombine.low %v1175, %v1183
        %v1201 = vcombine.high %v1175, %v1183
        %v1203 = vunpack.c.l.s4 1934713408
        %v1204 = vunpack.c.0.s8 %v1203
        %v1205 = vlaneseq
        %v1206 = vshrl.u32 %v1205, 7
        %v1207 = vsub.s32 %v1204, %v1206
        %v1208 = vrot.slane %v1200, %v1207
        %v1210 = vunpack.c.l.s4 1934713408
        %v1211 = vunpack.c.0.s8 %v1210
        %v1212 = vlaneseq
        %v1213 = vshrl.u32 %v1212, 7
        %v1214 = vsub.s32 %v1211, %v1213
        %v1215 = vrot.slane %v1201, %v1214
        %v1216 = vcombine.low %v1192, %v1208
        %v1217 = vcombine.high %v1192, %v1208
        %v1218 = vcombine.low %v1199, %v1215
        %v1219 = vcombine.high %v1199, %v1215
        %1221 = vrot.lane.b32.xlu0 %v924, 120
        %v1222 = vpop.permute.xlu0 %1221
        %1224 = vrot.lane.b32.xlu0 %v924, 112
        %v1225 = vpop.permute.xlu0 %1224
        %1227 = vrot.lane.b32.xlu0 %v924, 104
        %v1228 = vpop.permute.xlu0 %1227
        %v1230 = vcombine.low %v924, %v1225
        %v1231 = vcombine.high %v924, %v1225
        %v1233 = vunpack.c.l.s4 1983009808
        %v1234 = vunpack.c.0.s8 %v1233
        %v1235 = vlaneseq
        %v1236 = vshrl.u32 %v1235, 7
        %v1237 = vsub.s32 %v1234, %v1236
        %v1238 = vrot.slane %v1230, %v1237
        %v1240 = vunpack.c.l.s4 1983009808
        %v1241 = vunpack.c.0.s8 %v1240
        %v1242 = vlaneseq
        %v1243 = vshrl.u32 %v1242, 7
        %v1244 = vsub.s32 %v1241, %v1243
        %v1245 = vrot.slane %v1231, %v1244
        %v1246 = vcombine.low %v1222, %v1228
        %v1247 = vcombine.high %v1222, %v1228
        %v1249 = vunpack.c.l.s4 1983009808
        %v1250 = vunpack.c.0.s8 %v1249
        %v1251 = vlaneseq
        %v1252 = vshrl.u32 %v1251, 7
        %v1253 = vsub.s32 %v1250, %v1252
        %v1254 = vrot.slane %v1246, %v1253
        %v1256 = vunpack.c.l.s4 1983009808
        %v1257 = vunpack.c.0.s8 %v1256
        %v1258 = vlaneseq
        %v1259 = vshrl.u32 %v1258, 7
        %v1260 = vsub.s32 %v1257, %v1259
        %v1261 = vrot.slane %v1247, %v1260
        %v1262 = vcombine.low %v1238, %v1254
        %v1263 = vcombine.high %v1238, %v1254
        %v1265 = vunpack.c.l.s4 1934713408
        %v1266 = vunpack.c.0.s8 %v1265
        %v1267 = vlaneseq
        %v1268 = vshrl.u32 %v1267, 7
        %v1269 = vsub.s32 %v1266, %v1268
        %v1270 = vrot.slane %v1262, %v1269
        %v1272 = vunpack.c.l.s4 1934713408
        %v1273 = vunpack.c.0.s8 %v1272
        %v1274 = vlaneseq
        %v1275 = vshrl.u32 %v1274, 7
        %v1276 = vsub.s32 %v1273, %v1275
        %v1277 = vrot.slane %v1263, %v1276
        %v1278 = vcombine.low %v1245, %v1261
        %v1279 = vcombine.high %v1245, %v1261
        %v1281 = vunpack.c.l.s4 1934713408
        %v1282 = vunpack.c.0.s8 %v1281
        %v1283 = vlaneseq
        %v1284 = vshrl.u32 %v1283, 7
        %v1285 = vsub.s32 %v1282, %v1284
        %v1286 = vrot.slane %v1278, %v1285
        %v1288 = vunpack.c.l.s4 1934713408
        %v1289 = vunpack.c.0.s8 %v1288
        %v1290 = vlaneseq
        %v1291 = vshrl.u32 %v1290, 7
        %v1292 = vsub.s32 %v1289, %v1291
        %v1293 = vrot.slane %v1279, %v1292
        %v1294 = vcombine.high %v1270, 0.0
        %v1295 = vcombine.high %v1277, 0.0
        %v1296 = vcombine.high %v1286, 0.0
        %v1297 = vcombine.high %v1293, 0.0
        %v1298 = vcombine.low %v1270, %v1277
        %v1300 = vunpack.c.l.s4 1983009808
        %v1301 = vunpack.c.0.s8 %v1300
        %v1302 = vlaneseq
        %v1303 = vshrl.u32 %v1302, 7
        %v1304 = vsub.s32 %v1301, %v1303
        %v1305 = vrot.slane %v1298, %v1304
        %v1306 = vcombine.low %v1294, %v1295
        %v1308 = vunpack.c.l.s4 1983009808
        %v1309 = vunpack.c.0.s8 %v1308
        %v1310 = vlaneseq
        %v1311 = vshrl.u32 %v1310, 7
        %v1312 = vsub.s32 %v1309, %v1311
        %v1313 = vrot.slane %v1306, %v1312
        %v1314 = vcombine.low %v1286, %v1293
        %v1316 = vunpack.c.l.s4 1983009808
        %v1317 = vunpack.c.0.s8 %v1316
        %v1318 = vlaneseq
        %v1319 = vshrl.u32 %v1318, 7
        %v1320 = vsub.s32 %v1317, %v1319
        %v1321 = vrot.slane %v1314, %v1320
        %v1322 = vcombine.low %v1296, %v1297
        %v1324 = vunpack.c.l.s4 1983009808
        %v1325 = vunpack.c.0.s8 %v1324
        %v1326 = vlaneseq
        %v1327 = vshrl.u32 %v1326, 7
        %v1328 = vsub.s32 %v1325, %v1327
        %v1329 = vrot.slane %v1322, %v1328
        %v1330 = vcombine.low %v1305, %v1313
        %v1331 = vcombine.high %v1305, %v1313
        %v1333 = vunpack.c.l.s4 1934713408
        %v1334 = vunpack.c.0.s8 %v1333
        %v1335 = vlaneseq
        %v1336 = vshrl.u32 %v1335, 7
        %v1337 = vsub.s32 %v1334, %v1336
        %v1338 = vrot.slane %v1330, %v1337
        %v1340 = vunpack.c.l.s4 1934713408
        %v1341 = vunpack.c.0.s8 %v1340
        %v1342 = vlaneseq
        %v1343 = vshrl.u32 %v1342, 7
        %v1344 = vsub.s32 %v1341, %v1343
        %v1345 = vrot.slane %v1331, %v1344
        %v1346 = vcombine.low %v1321, %v1329
        %v1347 = vcombine.high %v1321, %v1329
        %v1349 = vunpack.c.l.s4 1934713408
        %v1350 = vunpack.c.0.s8 %v1349
        %v1351 = vlaneseq
        %v1352 = vshrl.u32 %v1351, 7
        %v1353 = vsub.s32 %v1350, %v1352
        %v1354 = vrot.slane %v1346, %v1353
        %v1356 = vunpack.c.l.s4 1934713408
        %v1357 = vunpack.c.0.s8 %v1356
        %v1358 = vlaneseq
        %v1359 = vshrl.u32 %v1358, 7
        %v1360 = vsub.s32 %v1357, %v1359
        %v1361 = vrot.slane %v1347, %v1360
        %v1362 = vcombine.low %v1338, %v1354
        %v1363 = vcombine.high %v1338, %v1354
        %v1364 = vcombine.low %v1345, %v1361
        %v1365 = vcombine.high %v1345, %v1361
        %v1367 = vlaneseq
        %v1368 = vshrl.u32 %v1367, 7
        %v1369 = vsub.s32 0, %v1368
        %v1370 = vrot.slane %v676, %v1369
        %vm1372 = vcmask 64512
        %v1374 = vsel %vm1372, %v1070, 0
        %v1377 = vsel %vm1372, %v1216, 0
        %1379 = vmatprep.subr.mxu0 0.0
        %1380 = vmatpush1.xpose.msra.mxu0 %v1377
        %1381 = vmatprep.subr.mxu0 0.0
        %1382 = vmatpush1.xpose.msra.mxu0 0.0
        %1383 = vmatprep.subr.mxu0 0.0
        %1384 = vmatpush1.xpose.msra.mxu0 0.0
        %1385 = vmatprep.subr.mxu0 0.0
        %1386 = vmatpush1.xpose.msra.mxu0 0.0
        %1387 = vmatprep.subr.mxu0 0.0
        %1388 = vmatpush1.xpose.msra.mxu0 0.0
        %1389 = vmatprep.subr.mxu0 0.0
        %1390 = vmatpush1.xpose.msra.mxu0 0.0
        %1391 = vmatprep.subr.mxu0 0.0
        %1392 = vmatpush1.xpose.msra.mxu0 0.0
        %1393 = vmatprep.subr.mxu0 0.0
        %1394 = vmatpush1.xpose.msra.mxu0 0.0
        %1395 = vmatprep.subr.mxu0 0.0
        %1396 = vmatpush1.xpose.msra.mxu0 0.0
        %1397 = vmatprep.subr.mxu0 0.0
        %1398 = vmatpush1.xpose.msra.mxu0 0.0
        %1399 = vmatprep.subr.mxu0 0.0
        %1400 = vmatpush1.xpose.msra.mxu0 0.0
        %1401 = vmatprep.subr.mxu0 0.0
        %1402 = vmatpush1.xpose.msra.mxu0 0.0
        %1403 = vmatprep.subr.mxu0 0.0
        %1404 = vmatpush1.xpose.msra.mxu0 0.0
        %1405 = vmatprep.subr.mxu0 0.0
        %1406 = vmatpush1.xpose.msra.mxu0 0.0
        %1407 = vmatprep.subr.mxu0 0.0
        %1408 = vmatpush1.xpose.msra.mxu0 0.0
        %1409 = vmatprep.subr.mxu0 0.0
        %1410 = vmatpush1.xpose.msra.mxu0 0.0
        %1411 = vmatprep.subr.mxu0 0.0
        %1412 = vmatpush1.xpose.msra.mxu0 0.0
        %1413 = vmatprep.subr.mxu0 0.0
        %1414 = vmatpush1.xpose.msra.mxu0 0.0
        %1415 = vmatprep.subr.mxu0 0.0
        %1416 = vmatpush1.xpose.msra.mxu0 0.0
        %1417 = vmatprep.subr.mxu0 0.0
        %1418 = vmatpush1.xpose.msra.mxu0 0.0
        %1419 = vmatprep.subr.mxu0 0.0
        %1420 = vmatpush1.xpose.msra.mxu0 0.0
        %1421 = vmatprep.subr.mxu0 0.0
        %1422 = vmatpush1.xpose.msra.mxu0 0.0
        %1423 = vmatprep.subr.mxu0 0.0
        %1424 = vmatpush1.xpose.msra.mxu0 0.0
        %1425 = vmatprep.subr.mxu0 0.0
        %1426 = vmatpush1.xpose.msra.mxu0 0.0
        %1427 = vmatprep.subr.mxu0 0.0
        %1428 = vmatpush1.xpose.msra.mxu0 0.0
        %1429 = vmatprep.subr.mxu0 0.0
        %1430 = vmatpush1.xpose.msra.mxu0 0.0
        %1431 = vmatprep.subr.mxu0 0.0
        %1432 = vmatpush1.xpose.msra.mxu0 0.0
        %1433 = vmatprep.subr.mxu0 0.0
        %1434 = vmatpush1.xpose.msra.mxu0 0.0
        %1435 = vmatprep.subr.mxu0 0.0
        %1436 = vmatpush1.xpose.msra.mxu0 0.0
        %1437 = vmatprep.subr.mxu0 0.0
        %1438 = vmatpush1.xpose.msra.mxu0 0.0
        %1439 = vmatprep.subr.mxu0 0.0
        %1440 = vmatpush1.xpose.msra.mxu0 0.0
        %1441 = vmatprep.subr.mxu0 0.0
        %1442 = vmatpush1.xpose.msra.mxu0 0.0
        %1443 = vmatprep.mubr.f32.mxu0 0.0
        %1444 = vmatmul.mubr.f32.gmra.mrb[0].mxu0 %v1374
        %v1445 = vpop.f32.mrb[0].mxu0
        %v1446 = vadd.f32 %v1370, %v1445
        %v1447 = vpop.f32.mrb[0].mxu0
        %1448 = vdwg.mxu0
        %v1450 = vsel %vm1372, %v1071, 0
        %v1453 = vsel %vm1372, %v1217, 0
        %1455 = vmatprep.subr.mxu0 0.0
        %1456 = vmatpush1.xpose.msra.mxu0 %v1453
        %1457 = vmatprep.subr.mxu0 0.0
        %1458 = vmatpush1.xpose.msra.mxu0 0.0
        %1459 = vmatprep.subr.mxu0 0.0
        %1460 = vmatpush1.xpose.msra.mxu0 0.0
        %1461 = vmatprep.subr.mxu0 0.0
        %1462 = vmatpush1.xpose.msra.mxu0 0.0
        %1463 = vmatprep.subr.mxu0 0.0
        %1464 = vmatpush1.xpose.msra.mxu0 0.0
        %1465 = vmatprep.subr.mxu0 0.0
        %1466 = vmatpush1.xpose.msra.mxu0 0.0
        %1467 = vmatprep.subr.mxu0 0.0
        %1468 = vmatpush1.xpose.msra.mxu0 0.0
        %1469 = vmatprep.subr.mxu0 0.0
        %1470 = vmatpush1.xpose.msra.mxu0 0.0
        %1471 = vmatprep.subr.mxu0 0.0
        %1472 = vmatpush1.xpose.msra.mxu0 0.0
        %1473 = vmatprep.subr.mxu0 0.0
        %1474 = vmatpush1.xpose.msra.mxu0 0.0
        %1475 = vmatprep.subr.mxu0 0.0
        %1476 = vmatpush1.xpose.msra.mxu0 0.0
        %1477 = vmatprep.subr.mxu0 0.0
        %1478 = vmatpush1.xpose.msra.mxu0 0.0
        %1479 = vmatprep.subr.mxu0 0.0
        %1480 = vmatpush1.xpose.msra.mxu0 0.0
        %1481 = vmatprep.subr.mxu0 0.0
        %1482 = vmatpush1.xpose.msra.mxu0 0.0
        %1483 = vmatprep.subr.mxu0 0.0
        %1484 = vmatpush1.xpose.msra.mxu0 0.0
        %1485 = vmatprep.subr.mxu0 0.0
        %1486 = vmatpush1.xpose.msra.mxu0 0.0
        %1487 = vmatprep.subr.mxu0 0.0
        %1488 = vmatpush1.xpose.msra.mxu0 0.0
        %1489 = vmatprep.subr.mxu0 0.0
        %1490 = vmatpush1.xpose.msra.mxu0 0.0
        %1491 = vmatprep.subr.mxu0 0.0
        %1492 = vmatpush1.xpose.msra.mxu0 0.0
        %1493 = vmatprep.subr.mxu0 0.0
        %1494 = vmatpush1.xpose.msra.mxu0 0.0
        %1495 = vmatprep.subr.mxu0 0.0
        %1496 = vmatpush1.xpose.msra.mxu0 0.0
        %1497 = vmatprep.subr.mxu0 0.0
        %1498 = vmatpush1.xpose.msra.mxu0 0.0
        %1499 = vmatprep.subr.mxu0 0.0
        %1500 = vmatpush1.xpose.msra.mxu0 0.0
        %1501 = vmatprep.subr.mxu0 0.0
        %1502 = vmatpush1.xpose.msra.mxu0 0.0
        %1503 = vmatprep.subr.mxu0 0.0
        %1504 = vmatpush1.xpose.msra.mxu0 0.0
        %1505 = vmatprep.subr.mxu0 0.0
        %1506 = vmatpush1.xpose.msra.mxu0 0.0
        %1507 = vmatprep.subr.mxu0 0.0
        %1508 = vmatpush1.xpose.msra.mxu0 0.0
        %1509 = vmatprep.subr.mxu0 0.0
        %1510 = vmatpush1.xpose.msra.mxu0 0.0
        %1511 = vmatprep.subr.mxu0 0.0
        %1512 = vmatpush1.xpose.msra.mxu0 0.0
        %1513 = vmatprep.subr.mxu0 0.0
        %1514 = vmatpush1.xpose.msra.mxu0 0.0
        %1515 = vmatprep.subr.mxu0 0.0
        %1516 = vmatpush1.xpose.msra.mxu0 0.0
        %1517 = vmatprep.subr.mxu0 0.0
        %1518 = vmatpush1.xpose.msra.mxu0 0.0
        %1519 = vmatprep.mubr.f32.mxu0 0.0
        %1520 = vmatmul.mubr.f32.gmra.mrb[0].mxu0 %v1450
        %v1521 = vpop.f32.mrb[0].mxu0
        %v1522 = vadd.f32 %v1370, %v1521
        %v1523 = vpop.f32.mrb[0].mxu0
        %1524 = vdwg.mxu0
        %v1526 = vsel %vm1372, %v1072, 0
        %v1529 = vsel %vm1372, %v1218, 0
        %1531 = vmatprep.subr.mxu0 0.0
        %1532 = vmatpush1.xpose.msra.mxu0 %v1529
        %1533 = vmatprep.subr.mxu0 0.0
        %1534 = vmatpush1.xpose.msra.mxu0 0.0
        %1535 = vmatprep.subr.mxu0 0.0
        %1536 = vmatpush1.xpose.msra.mxu0 0.0
        %1537 = vmatprep.subr.mxu0 0.0
        %1538 = vmatpush1.xpose.msra.mxu0 0.0
        %1539 = vmatprep.subr.mxu0 0.0
        %1540 = vmatpush1.xpose.msra.mxu0 0.0
        %1541 = vmatprep.subr.mxu0 0.0
        %1542 = vmatpush1.xpose.msra.mxu0 0.0
        %1543 = vmatprep.subr.mxu0 0.0
        %1544 = vmatpush1.xpose.msra.mxu0 0.0
        %1545 = vmatprep.subr.mxu0 0.0
        %1546 = vmatpush1.xpose.msra.mxu0 0.0
        %1547 = vmatprep.subr.mxu0 0.0
        %1548 = vmatpush1.xpose.msra.mxu0 0.0
        %1549 = vmatprep.subr.mxu0 0.0
        %1550 = vmatpush1.xpose.msra.mxu0 0.0
        %1551 = vmatprep.subr.mxu0 0.0
        %1552 = vmatpush1.xpose.msra.mxu0 0.0
        %1553 = vmatprep.subr.mxu0 0.0
        %1554 = vmatpush1.xpose.msra.mxu0 0.0
        %1555 = vmatprep.subr.mxu0 0.0
        %1556 = vmatpush1.xpose.msra.mxu0 0.0
        %1557 = vmatprep.subr.mxu0 0.0
        %1558 = vmatpush1.xpose.msra.mxu0 0.0
        %1559 = vmatprep.subr.mxu0 0.0
        %1560 = vmatpush1.xpose.msra.mxu0 0.0
        %1561 = vmatprep.subr.mxu0 0.0
        %1562 = vmatpush1.xpose.msra.mxu0 0.0
        %1563 = vmatprep.subr.mxu0 0.0
        %1564 = vmatpush1.xpose.msra.mxu0 0.0
        %1565 = vmatprep.subr.mxu0 0.0
        %1566 = vmatpush1.xpose.msra.mxu0 0.0
        %1567 = vmatprep.subr.mxu0 0.0
        %1568 = vmatpush1.xpose.msra.mxu0 0.0
        %1569 = vmatprep.subr.mxu0 0.0
        %1570 = vmatpush1.xpose.msra.mxu0 0.0
        %1571 = vmatprep.subr.mxu0 0.0
        %1572 = vmatpush1.xpose.msra.mxu0 0.0
        %1573 = vmatprep.subr.mxu0 0.0
        %1574 = vmatpush1.xpose.msra.mxu0 0.0
        %1575 = vmatprep.subr.mxu0 0.0
        %1576 = vmatpush1.xpose.msra.mxu0 0.0
        %1577 = vmatprep.subr.mxu0 0.0
        %1578 = vmatpush1.xpose.msra.mxu0 0.0
        %1579 = vmatprep.subr.mxu0 0.0
        %1580 = vmatpush1.xpose.msra.mxu0 0.0
        %1581 = vmatprep.subr.mxu0 0.0
        %1582 = vmatpush1.xpose.msra.mxu0 0.0
        %1583 = vmatprep.subr.mxu0 0.0
        %1584 = vmatpush1.xpose.msra.mxu0 0.0
        %1585 = vmatprep.subr.mxu0 0.0
        %1586 = vmatpush1.xpose.msra.mxu0 0.0
        %1587 = vmatprep.subr.mxu0 0.0
        %1588 = vmatpush1.xpose.msra.mxu0 0.0
        %1589 = vmatprep.subr.mxu0 0.0
        %1590 = vmatpush1.xpose.msra.mxu0 0.0
        %1591 = vmatprep.subr.mxu0 0.0
        %1592 = vmatpush1.xpose.msra.mxu0 0.0
        %1593 = vmatprep.subr.mxu0 0.0
        %1594 = vmatpush1.xpose.msra.mxu0 0.0
        %1595 = vmatprep.mubr.f32.mxu0 0.0
        %1596 = vmatmul.mubr.f32.gmra.mrb[0].mxu0 %v1526
        %v1597 = vpop.f32.mrb[0].mxu0
        %v1598 = vadd.f32 %v1370, %v1597
        %v1599 = vpop.f32.mrb[0].mxu0
        %1600 = vdwg.mxu0
        %v1602 = vsel %vm1372, %v1073, 0
        %v1605 = vsel %vm1372, %v1219, 0
        %1607 = vmatprep.subr.mxu0 0.0
        %1608 = vmatpush1.xpose.msra.mxu0 %v1605
        %1609 = vmatprep.subr.mxu0 0.0
        %1610 = vmatpush1.xpose.msra.mxu0 0.0
        %1611 = vmatprep.subr.mxu0 0.0
        %1612 = vmatpush1.xpose.msra.mxu0 0.0
        %1613 = vmatprep.subr.mxu0 0.0
        %1614 = vmatpush1.xpose.msra.mxu0 0.0
        %1615 = vmatprep.subr.mxu0 0.0
        %1616 = vmatpush1.xpose.msra.mxu0 0.0
        %1617 = vmatprep.subr.mxu0 0.0
        %1618 = vmatpush1.xpose.msra.mxu0 0.0
        %1619 = vmatprep.subr.mxu0 0.0
        %1620 = vmatpush1.xpose.msra.mxu0 0.0
        %1621 = vmatprep.subr.mxu0 0.0
        %1622 = vmatpush1.xpose.msra.mxu0 0.0
        %1623 = vmatprep.subr.mxu0 0.0
        %1624 = vmatpush1.xpose.msra.mxu0 0.0
        %1625 = vmatprep.subr.mxu0 0.0
        %1626 = vmatpush1.xpose.msra.mxu0 0.0
        %1627 = vmatprep.subr.mxu0 0.0
        %1628 = vmatpush1.xpose.msra.mxu0 0.0
        %1629 = vmatprep.subr.mxu0 0.0
        %1630 = vmatpush1.xpose.msra.mxu0 0.0
        %1631 = vmatprep.subr.mxu0 0.0
        %1632 = vmatpush1.xpose.msra.mxu0 0.0
        %1633 = vmatprep.subr.mxu0 0.0
        %1634 = vmatpush1.xpose.msra.mxu0 0.0
        %1635 = vmatprep.subr.mxu0 0.0
        %1636 = vmatpush1.xpose.msra.mxu0 0.0
        %1637 = vmatprep.subr.mxu0 0.0
        %1638 = vmatpush1.xpose.msra.mxu0 0.0
        %1639 = vmatprep.subr.mxu0 0.0
        %1640 = vmatpush1.xpose.msra.mxu0 0.0
        %1641 = vmatprep.subr.mxu0 0.0
        %1642 = vmatpush1.xpose.msra.mxu0 0.0
        %1643 = vmatprep.subr.mxu0 0.0
        %1644 = vmatpush1.xpose.msra.mxu0 0.0
        %1645 = vmatprep.subr.mxu0 0.0
        %1646 = vmatpush1.xpose.msra.mxu0 0.0
        %1647 = vmatprep.subr.mxu0 0.0
        %1648 = vmatpush1.xpose.msra.mxu0 0.0
        %1649 = vmatprep.subr.mxu0 0.0
        %1650 = vmatpush1.xpose.msra.mxu0 0.0
        %1651 = vmatprep.subr.mxu0 0.0
        %1652 = vmatpush1.xpose.msra.mxu0 0.0
        %1653 = vmatprep.subr.mxu0 0.0
        %1654 = vmatpush1.xpose.msra.mxu0 0.0
        %1655 = vmatprep.subr.mxu0 0.0
        %1656 = vmatpush1.xpose.msra.mxu0 0.0
        %1657 = vmatprep.subr.mxu0 0.0
        %1658 = vmatpush1.xpose.msra.mxu0 0.0
        %1659 = vmatprep.subr.mxu0 0.0
        %1660 = vmatpush1.xpose.msra.mxu0 0.0
        %1661 = vmatprep.subr.mxu0 0.0
        %1662 = vmatpush1.xpose.msra.mxu0 0.0
        %1663 = vmatprep.subr.mxu0 0.0
        %1664 = vmatpush1.xpose.msra.mxu0 0.0
        %1665 = vmatprep.subr.mxu0 0.0
        %1666 = vmatpush1.xpose.msra.mxu0 0.0
        %1667 = vmatprep.subr.mxu0 0.0
        %1668 = vmatpush1.xpose.msra.mxu0 0.0
        %1669 = vmatprep.subr.mxu0 0.0
        %1670 = vmatpush1.xpose.msra.mxu0 0.0
        %1671 = vmatprep.mubr.f32.mxu0 0.0
        %1672 = vmatmul.mubr.f32.gmra.mrb[0].mxu0 %v1602
        %v1673 = vpop.f32.mrb[0].mxu0
        %v1674 = vadd.f32 %v1370, %v1673
        %v1675 = vpop.f32.mrb[0].mxu0
        %1676 = vdwg.mxu0
        %v1677 = vsel %vm1372, %v1446, -inf
        %1678 = vmax.xlane.f32.xlu0 %v1677
        %v1679 = vpop.xlane.xlu0 %1678
        %v1680 = vsel %vm1372, %v1522, -inf
        %1681 = vmax.xlane.f32.xlu0 %v1680
        %v1682 = vpop.xlane.xlu0 %1681
        %v1683 = vsel %vm1372, %v1598, -inf
        %1684 = vmax.xlane.f32.xlu0 %v1683
        %v1685 = vpop.xlane.xlu0 %1684
        %v1686 = vsel %vm1372, %v1674, -inf
        %1687 = vmax.xlane.f32.xlu0 %v1686
        %v1688 = vpop.xlane.xlu0 %1687
        %v1689 = vsub.f32 %v1446, %v1679
        %v1690 = vsub.f32 %v1522, %v1682
        %v1691 = vsub.f32 %v1598, %v1685
        %v1692 = vsub.f32 %v1674, %v1688
        %v1693 = vmul.f32 %v1689, 1.442695
        %v1694 = vpow.pop %v1693
        %v1695 = vmul.f32 %v1690, 1.442695
        %v1696 = vpow.pop %v1695
        %v1697 = vmul.f32 %v1691, 1.442695
        %v1698 = vpow.pop %v1697
        %v1699 = vmul.f32 %v1692, 1.442695
        %v1700 = vpow.pop %v1699
        %v1701 = vsel %vm1372, %v1694, 0.0
        %1702 = vadd.xlane.f32.xlu0 %v1701
        %v1703 = vpop.xlane.xlu0 %1702
        %v1704 = vsel %vm1372, %v1696, 0.0
        %1705 = vadd.xlane.f32.xlu0 %v1704
        %v1706 = vpop.xlane.xlu0 %1705
        %v1707 = vsel %vm1372, %v1698, 0.0
        %1708 = vadd.xlane.f32.xlu0 %v1707
        %v1709 = vpop.xlane.xlu0 %1708
        %v1710 = vsel %vm1372, %v1700, 0.0
        %1711 = vadd.xlane.f32.xlu0 %v1710
        %v1712 = vpop.xlane.xlu0 %1711
        %v1713 = vrcp.pop %v1703
        %v1714 = vrcp.pop %v1706
        %v1715 = vrcp.pop %v1709
        %v1716 = vrcp.pop %v1712
        %v1717 = vmul.f32 %v1694, %v1713
        %v1718 = vmul.f32 %v1696, %v1714
        %v1719 = vmul.f32 %v1698, %v1715
        %v1720 = vmul.f32 %v1700, %v1716
        %v1722 = vsel %vm1372, %v1717, 0
        %1724 = vmatprep.subr.mxu0 0.0
        %1725 = vmatpush1.msra.mxu0 %v1362
        %1726 = vmatprep.subr.mxu0 0.0
        %1727 = vmatpush1.msra.mxu0 0.0
        %1728 = vmatprep.subr.mxu0 0.0
        %1729 = vmatpush1.msra.mxu0 0.0
        %1730 = vmatprep.subr.mxu0 0.0
        %1731 = vmatpush1.msra.mxu0 0.0
        %1732 = vmatprep.subr.mxu0 0.0
        %1733 = vmatpush1.msra.mxu0 0.0
        %1734 = vmatprep.subr.mxu0 0.0
        %1735 = vmatpush1.msra.mxu0 0.0
        %1736 = vmatprep.subr.mxu0 0.0
        %1737 = vmatpush1.msra.mxu0 0.0
        %1738 = vmatprep.subr.mxu0 0.0
        %1739 = vmatpush1.msra.mxu0 0.0
        %1740 = vmatprep.subr.mxu0 0.0
        %1741 = vmatpush1.msra.mxu0 0.0
        %1742 = vmatprep.subr.mxu0 0.0
        %1743 = vmatpush1.msra.mxu0 0.0
        %1744 = vmatprep.subr.mxu0 0.0
        %1745 = vmatpush1.msra.mxu0 0.0
        %1746 = vmatprep.subr.mxu0 0.0
        %1747 = vmatpush1.msra.mxu0 0.0
        %1748 = vmatprep.subr.mxu0 0.0
        %1749 = vmatpush1.msra.mxu0 0.0
        %1750 = vmatprep.subr.mxu0 0.0
        %1751 = vmatpush1.msra.mxu0 0.0
        %1752 = vmatprep.subr.mxu0 0.0
        %1753 = vmatpush1.msra.mxu0 0.0
        %1754 = vmatprep.subr.mxu0 0.0
        %1755 = vmatpush1.msra.mxu0 0.0
        %1756 = vmatprep.subr.mxu0 0.0
        %1757 = vmatpush1.msra.mxu0 0.0
        %1758 = vmatprep.subr.mxu0 0.0
        %1759 = vmatpush1.msra.mxu0 0.0
        %1760 = vmatprep.subr.mxu0 0.0
        %1761 = vmatpush1.msra.mxu0 0.0
        %1762 = vmatprep.subr.mxu0 0.0
        %1763 = vmatpush1.msra.mxu0 0.0
        %1764 = vmatprep.subr.mxu0 0.0
        %1765 = vmatpush1.msra.mxu0 0.0
        %1766 = vmatprep.subr.mxu0 0.0
        %1767 = vmatpush1.msra.mxu0 0.0
        %1768 = vmatprep.subr.mxu0 0.0
        %1769 = vmatpush1.msra.mxu0 0.0
        %1770 = vmatprep.subr.mxu0 0.0
        %1771 = vmatpush1.msra.mxu0 0.0
        %1772 = vmatprep.subr.mxu0 0.0
        %1773 = vmatpush1.msra.mxu0 0.0
        %1774 = vmatprep.subr.mxu0 0.0
        %1775 = vmatpush1.msra.mxu0 0.0
        %1776 = vmatprep.subr.mxu0 0.0
        %1777 = vmatpush1.msra.mxu0 0.0
        %1778 = vmatprep.subr.mxu0 0.0
        %1779 = vmatpush1.msra.mxu0 0.0
        %1780 = vmatprep.subr.mxu0 0.0
        %1781 = vmatpush1.msra.mxu0 0.0
        %1782 = vmatprep.subr.mxu0 0.0
        %1783 = vmatpush1.msra.mxu0 0.0
        %1784 = vmatprep.subr.mxu0 0.0
        %1785 = vmatpush1.msra.mxu0 0.0
        %1786 = vmatprep.subr.mxu0 0.0
        %1787 = vmatpush1.msra.mxu0 0.0
        %1788 = vmatprep.mubr.f32.mxu0 0.0
        %1789 = vmatmul.mubr.f32.gmra.mrb[0].mxu0 %v1722
        %v1790 = vpop.f32.mrb[0].mxu0
        %v1791 = vadd.f32 0.0, %v1790
        %v1792 = vpop.f32.mrb[0].mxu0
        %1793 = vdwg.mxu0
        %v1795 = vsel %vm1372, %v1718, 0
        %1797 = vmatprep.subr.mxu0 0.0
        %1798 = vmatpush1.msra.mxu0 %v1363
        %1799 = vmatprep.subr.mxu0 0.0
        %1800 = vmatpush1.msra.mxu0 0.0
        %1801 = vmatprep.subr.mxu0 0.0
        %1802 = vmatpush1.msra.mxu0 0.0
        %1803 = vmatprep.subr.mxu0 0.0
        %1804 = vmatpush1.msra.mxu0 0.0
        %1805 = vmatprep.subr.mxu0 0.0
        %1806 = vmatpush1.msra.mxu0 0.0
        %1807 = vmatprep.subr.mxu0 0.0
        %1808 = vmatpush1.msra.mxu0 0.0
        %1809 = vmatprep.subr.mxu0 0.0
        %1810 = vmatpush1.msra.mxu0 0.0
        %1811 = vmatprep.subr.mxu0 0.0
        %1812 = vmatpush1.msra.mxu0 0.0
        %1813 = vmatprep.subr.mxu0 0.0
        %1814 = vmatpush1.msra.mxu0 0.0
        %1815 = vmatprep.subr.mxu0 0.0
        %1816 = vmatpush1.msra.mxu0 0.0
        %1817 = vmatprep.subr.mxu0 0.0
        %1818 = vmatpush1.msra.mxu0 0.0
        %1819 = vmatprep.subr.mxu0 0.0
        %1820 = vmatpush1.msra.mxu0 0.0
        %1821 = vmatprep.subr.mxu0 0.0
        %1822 = vmatpush1.msra.mxu0 0.0
        %1823 = vmatprep.subr.mxu0 0.0
        %1824 = vmatpush1.msra.mxu0 0.0
        %1825 = vmatprep.subr.mxu0 0.0
        %1826 = vmatpush1.msra.mxu0 0.0
        %1827 = vmatprep.subr.mxu0 0.0
        %1828 = vmatpush1.msra.mxu0 0.0
        %1829 = vmatprep.subr.mxu0 0.0
        %1830 = vmatpush1.msra.mxu0 0.0
        %1831 = vmatprep.subr.mxu0 0.0
        %1832 = vmatpush1.msra.mxu0 0.0
        %1833 = vmatprep.subr.mxu0 0.0
        %1834 = vmatpush1.msra.mxu0 0.0
        %1835 = vmatprep.subr.mxu0 0.0
        %1836 = vmatpush1.msra.mxu0 0.0
        %1837 = vmatprep.subr.mxu0 0.0
        %1838 = vmatpush1.msra.mxu0 0.0
        %1839 = vmatprep.subr.mxu0 0.0
        %1840 = vmatpush1.msra.mxu0 0.0
        %1841 = vmatprep.subr.mxu0 0.0
        %1842 = vmatpush1.msra.mxu0 0.0
        %1843 = vmatprep.subr.mxu0 0.0
        %1844 = vmatpush1.msra.mxu0 0.0
        %1845 = vmatprep.subr.mxu0 0.0
        %1846 = vmatpush1.msra.mxu0 0.0
        %1847 = vmatprep.subr.mxu0 0.0
        %1848 = vmatpush1.msra.mxu0 0.0
        %1849 = vmatprep.subr.mxu0 0.0
        %1850 = vmatpush1.msra.mxu0 0.0
        %1851 = vmatprep.subr.mxu0 0.0
        %1852 = vmatpush1.msra.mxu0 0.0
        %1853 = vmatprep.subr.mxu0 0.0
        %1854 = vmatpush1.msra.mxu0 0.0
        %1855 = vmatprep.subr.mxu0 0.0
        %1856 = vmatpush1.msra.mxu0 0.0
        %1857 = vmatprep.subr.mxu0 0.0
        %1858 = vmatpush1.msra.mxu0 0.0
        %1859 = vmatprep.subr.mxu0 0.0
        %1860 = vmatpush1.msra.mxu0 0.0
        %1861 = vmatprep.mubr.f32.mxu0 0.0
        %1862 = vmatmul.mubr.f32.gmra.mrb[0].mxu0 %v1795
        %v1863 = vpop.f32.mrb[0].mxu0
        %v1864 = vadd.f32 0.0, %v1863
        %v1865 = vpop.f32.mrb[0].mxu0
        %1866 = vdwg.mxu0
        %v1868 = vsel %vm1372, %v1719, 0
        %1870 = vmatprep.subr.mxu0 0.0
        %1871 = vmatpush1.msra.mxu0 %v1364
        %1872 = vmatprep.subr.mxu0 0.0
        %1873 = vmatpush1.msra.mxu0 0.0
        %1874 = vmatprep.subr.mxu0 0.0
        %1875 = vmatpush1.msra.mxu0 0.0
        %1876 = vmatprep.subr.mxu0 0.0
        %1877 = vmatpush1.msra.mxu0 0.0
        %1878 = vmatprep.subr.mxu0 0.0
        %1879 = vmatpush1.msra.mxu0 0.0
        %1880 = vmatprep.subr.mxu0 0.0
        %1881 = vmatpush1.msra.mxu0 0.0
        %1882 = vmatprep.subr.mxu0 0.0
        %1883 = vmatpush1.msra.mxu0 0.0
        %1884 = vmatprep.subr.mxu0 0.0
        %1885 = vmatpush1.msra.mxu0 0.0
        %1886 = vmatprep.subr.mxu0 0.0
        %1887 = vmatpush1.msra.mxu0 0.0
        %1888 = vmatprep.subr.mxu0 0.0
        %1889 = vmatpush1.msra.mxu0 0.0
        %1890 = vmatprep.subr.mxu0 0.0
        %1891 = vmatpush1.msra.mxu0 0.0
        %1892 = vmatprep.subr.mxu0 0.0
        %1893 = vmatpush1.msra.mxu0 0.0
        %1894 = vmatprep.subr.mxu0 0.0
        %1895 = vmatpush1.msra.mxu0 0.0
        %1896 = vmatprep.subr.mxu0 0.0
        %1897 = vmatpush1.msra.mxu0 0.0
        %1898 = vmatprep.subr.mxu0 0.0
        %1899 = vmatpush1.msra.mxu0 0.0
        %1900 = vmatprep.subr.mxu0 0.0
        %1901 = vmatpush1.msra.mxu0 0.0
        %1902 = vmatprep.subr.mxu0 0.0
        %1903 = vmatpush1.msra.mxu0 0.0
        %1904 = vmatprep.subr.mxu0 0.0
        %1905 = vmatpush1.msra.mxu0 0.0
        %1906 = vmatprep.subr.mxu0 0.0
        %1907 = vmatpush1.msra.mxu0 0.0
        %1908 = vmatprep.subr.mxu0 0.0
        %1909 = vmatpush1.msra.mxu0 0.0
        %1910 = vmatprep.subr.mxu0 0.0
        %1911 = vmatpush1.msra.mxu0 0.0
        %1912 = vmatprep.subr.mxu0 0.0
        %1913 = vmatpush1.msra.mxu0 0.0
        %1914 = vmatprep.subr.mxu0 0.0
        %1915 = vmatpush1.msra.mxu0 0.0
        %1916 = vmatprep.subr.mxu0 0.0
        %1917 = vmatpush1.msra.mxu0 0.0
        %1918 = vmatprep.subr.mxu0 0.0
        %1919 = vmatpush1.msra.mxu0 0.0
        %1920 = vmatprep.subr.mxu0 0.0
        %1921 = vmatpush1.msra.mxu0 0.0
        %1922 = vmatprep.subr.mxu0 0.0
        %1923 = vmatpush1.msra.mxu0 0.0
        %1924 = vmatprep.subr.mxu0 0.0
        %1925 = vmatpush1.msra.mxu0 0.0
        %1926 = vmatprep.subr.mxu0 0.0
        %1927 = vmatpush1.msra.mxu0 0.0
        %1928 = vmatprep.subr.mxu0 0.0
        %1929 = vmatpush1.msra.mxu0 0.0
        %1930 = vmatprep.subr.mxu0 0.0
        %1931 = vmatpush1.msra.mxu0 0.0
        %1932 = vmatprep.subr.mxu0 0.0
        %1933 = vmatpush1.msra.mxu0 0.0
        %1934 = vmatprep.mubr.f32.mxu0 0.0
        %1935 = vmatmul.mubr.f32.gmra.mrb[0].mxu0 %v1868
        %v1936 = vpop.f32.mrb[0].mxu0
        %v1937 = vadd.f32 0.0, %v1936
        %v1938 = vpop.f32.mrb[0].mxu0
        %1939 = vdwg.mxu0
        %v1941 = vsel %vm1372, %v1720, 0
        %1943 = vmatprep.subr.mxu0 0.0
        %1944 = vmatpush1.msra.mxu0 %v1365
        %1945 = vmatprep.subr.mxu0 0.0
        %1946 = vmatpush1.msra.mxu0 0.0
        %1947 = vmatprep.subr.mxu0 0.0
        %1948 = vmatpush1.msra.mxu0 0.0
        %1949 = vmatprep.subr.mxu0 0.0
        %1950 = vmatpush1.msra.mxu0 0.0
        %1951 = vmatprep.subr.mxu0 0.0
        %1952 = vmatpush1.msra.mxu0 0.0
        %1953 = vmatprep.subr.mxu0 0.0
        %1954 = vmatpush1.msra.mxu0 0.0
        %1955 = vmatprep.subr.mxu0 0.0
        %1956 = vmatpush1.msra.mxu0 0.0
        %1957 = vmatprep.subr.mxu0 0.0
        %1958 = vmatpush1.msra.mxu0 0.0
        %1959 = vmatprep.subr.mxu0 0.0
        %1960 = vmatpush1.msra.mxu0 0.0
        %1961 = vmatprep.subr.mxu0 0.0
        %1962 = vmatpush1.msra.mxu0 0.0
        %1963 = vmatprep.subr.mxu0 0.0
        %1964 = vmatpush1.msra.mxu0 0.0
        %1965 = vmatprep.subr.mxu0 0.0
        %1966 = vmatpush1.msra.mxu0 0.0
        %1967 = vmatprep.subr.mxu0 0.0
        %1968 = vmatpush1.msra.mxu0 0.0
        %1969 = vmatprep.subr.mxu0 0.0
        %1970 = vmatpush1.msra.mxu0 0.0
        %1971 = vmatprep.subr.mxu0 0.0
        %1972 = vmatpush1.msra.mxu0 0.0
        %1973 = vmatprep.subr.mxu0 0.0
        %1974 = vmatpush1.msra.mxu0 0.0
        %1975 = vmatprep.subr.mxu0 0.0
        %1976 = vmatpush1.msra.mxu0 0.0
        %1977 = vmatprep.subr.mxu0 0.0
        %1978 = vmatpush1.msra.mxu0 0.0
        %1979 = vmatprep.subr.mxu0 0.0
        %1980 = vmatpush1.msra.mxu0 0.0
        %1981 = vmatprep.subr.mxu0 0.0
        %1982 = vmatpush1.msra.mxu0 0.0
        %1983 = vmatprep.subr.mxu0 0.0
        %1984 = vmatpush1.msra.mxu0 0.0
        %1985 = vmatprep.subr.mxu0 0.0
        %1986 = vmatpush1.msra.mxu0 0.0
        %1987 = vmatprep.subr.mxu0 0.0
        %1988 = vmatpush1.msra.mxu0 0.0
        %1989 = vmatprep.subr.mxu0 0.0
        %1990 = vmatpush1.msra.mxu0 0.0
        %1991 = vmatprep.subr.mxu0 0.0
        %1992 = vmatpush1.msra.mxu0 0.0
        %1993 = vmatprep.subr.mxu0 0.0
        %1994 = vmatpush1.msra.mxu0 0.0
        %1995 = vmatprep.subr.mxu0 0.0
        %1996 = vmatpush1.msra.mxu0 0.0
        %1997 = vmatprep.subr.mxu0 0.0
        %1998 = vmatpush1.msra.mxu0 0.0
        %1999 = vmatprep.subr.mxu0 0.0
        %2000 = vmatpush1.msra.mxu0 0.0
        %2001 = vmatprep.subr.mxu0 0.0
        %2002 = vmatpush1.msra.mxu0 0.0
        %2003 = vmatprep.subr.mxu0 0.0
        %2004 = vmatpush1.msra.mxu0 0.0
        %2005 = vmatprep.subr.mxu0 0.0
        %2006 = vmatpush1.msra.mxu0 0.0
        %2007 = vmatprep.mubr.f32.mxu0 0.0
        %2008 = vmatmul.mubr.f32.gmra.mrb[0].mxu0 %v1941
        %v2009 = vpop.f32.mrb[0].mxu0
        %v2010 = vadd.f32 0.0, %v2009
        %v2011 = vpop.f32.mrb[0].mxu0
        %2012 = vdwg.mxu0
        %v2013 = vcombine.low %v1791, %v1937
        %v2014 = vcombine.high %v1791, %v1937
        %v2016 = vunpack.c.l.s4 1983009808
        %v2017 = vunpack.c.0.s8 %v2016
        %v2018 = vlaneseq
        %v2019 = vshrl.u32 %v2018, 7
        %v2020 = vsub.s32 %v2017, %v2019
        %v2021 = vrot.slane %v2013, %v2020
        %v2023 = vunpack.c.l.s4 1983009808
        %v2024 = vunpack.c.0.s8 %v2023
        %v2025 = vlaneseq
        %v2026 = vshrl.u32 %v2025, 7
        %v2027 = vsub.s32 %v2024, %v2026
        %v2028 = vrot.slane %v2014, %v2027
        %v2029 = vcombine.low %v1864, %v2010
        %v2030 = vcombine.high %v1864, %v2010
        %v2032 = vunpack.c.l.s4 1983009808
        %v2033 = vunpack.c.0.s8 %v2032
        %v2034 = vlaneseq
        %v2035 = vshrl.u32 %v2034, 7
        %v2036 = vsub.s32 %v2033, %v2035
        %v2037 = vrot.slane %v2029, %v2036
        %v2039 = vunpack.c.l.s4 1983009808
        %v2040 = vunpack.c.0.s8 %v2039
        %v2041 = vlaneseq
        %v2042 = vshrl.u32 %v2041, 7
        %v2043 = vsub.s32 %v2040, %v2042
        %v2044 = vrot.slane %v2030, %v2043
        %v2045 = vcombine.low %v2021, %v2037
        %v2046 = vcombine.high %v2021, %v2037
        %v2048 = vunpack.c.l.s4 1934713408
        %v2049 = vunpack.c.0.s8 %v2048
        %v2050 = vlaneseq
        %v2051 = vshrl.u32 %v2050, 7
        %v2052 = vsub.s32 %v2049, %v2051
        %v2053 = vrot.slane %v2045, %v2052
        %v2055 = vunpack.c.l.s4 1934713408
        %v2056 = vunpack.c.0.s8 %v2055
        %v2057 = vlaneseq
        %v2058 = vshrl.u32 %v2057, 7
        %v2059 = vsub.s32 %v2056, %v2058
        %v2060 = vrot.slane %v2046, %v2059
        %v2061 = vcombine.low %v2028, %v2044
        %v2062 = vcombine.high %v2028, %v2044
        %v2064 = vunpack.c.l.s4 1934713408
        %v2065 = vunpack.c.0.s8 %v2064
        %v2066 = vlaneseq
        %v2067 = vshrl.u32 %v2066, 7
        %v2068 = vsub.s32 %v2065, %v2067
        %v2069 = vrot.slane %v2061, %v2068
        %v2071 = vunpack.c.l.s4 1934713408
        %v2072 = vunpack.c.0.s8 %v2071
        %v2073 = vlaneseq
        %v2074 = vshrl.u32 %v2073, 7
        %v2075 = vsub.s32 %v2072, %v2074
        %v2076 = vrot.slane %v2062, %v2075
        %v2077 = vcombine.high %v2053, 0.0
        %v2078 = vcombine.high %v2060, 0.0
        %v2079 = vcombine.high %v2069, 0.0
        %v2080 = vcombine.high %v2076, 0.0
        %v2081 = vcombine.low %v2053, %v2060
        %v2083 = vunpack.c.l.s4 1983009808
        %v2084 = vunpack.c.0.s8 %v2083
        %v2085 = vlaneseq
        %v2086 = vshrl.u32 %v2085, 7
        %v2087 = vsub.s32 %v2084, %v2086
        %v2088 = vrot.slane %v2081, %v2087
        %v2089 = vcombine.low %v2077, %v2078
        %v2091 = vunpack.c.l.s4 1983009808
        %v2092 = vunpack.c.0.s8 %v2091
        %v2093 = vlaneseq
        %v2094 = vshrl.u32 %v2093, 7
        %v2095 = vsub.s32 %v2092, %v2094
        %v2096 = vrot.slane %v2089, %v2095
        %v2097 = vcombine.low %v2069, %v2076
        %v2099 = vunpack.c.l.s4 1983009808
        %v2100 = vunpack.c.0.s8 %v2099
        %v2101 = vlaneseq
        %v2102 = vshrl.u32 %v2101, 7
        %v2103 = vsub.s32 %v2100, %v2102
        %v2104 = vrot.slane %v2097, %v2103
        %v2105 = vcombine.low %v2079, %v2080
        %v2107 = vunpack.c.l.s4 1983009808
        %v2108 = vunpack.c.0.s8 %v2107
        %v2109 = vlaneseq
        %v2110 = vshrl.u32 %v2109, 7
        %v2111 = vsub.s32 %v2108, %v2110
        %v2112 = vrot.slane %v2105, %v2111
        %v2113 = vcombine.low %v2088, %v2096
        %v2114 = vcombine.high %v2088, %v2096
        %v2116 = vunpack.c.l.s4 1934713408
        %v2117 = vunpack.c.0.s8 %v2116
        %v2118 = vlaneseq
        %v2119 = vshrl.u32 %v2118, 7
        %v2120 = vsub.s32 %v2117, %v2119
        %v2121 = vrot.slane %v2113, %v2120
        %v2123 = vunpack.c.l.s4 1934713408
        %v2124 = vunpack.c.0.s8 %v2123
        %v2125 = vlaneseq
        %v2126 = vshrl.u32 %v2125, 7
        %v2127 = vsub.s32 %v2124, %v2126
        %v2128 = vrot.slane %v2114, %v2127
        %v2129 = vcombine.low %v2104, %v2112
        %v2130 = vcombine.high %v2104, %v2112
        %v2132 = vunpack.c.l.s4 1934713408
        %v2133 = vunpack.c.0.s8 %v2132
        %v2134 = vlaneseq
        %v2135 = vshrl.u32 %v2134, 7
        %v2136 = vsub.s32 %v2133, %v2135
        %v2137 = vrot.slane %v2129, %v2136
        %v2139 = vunpack.c.l.s4 1934713408
        %v2140 = vunpack.c.0.s8 %v2139
        %v2141 = vlaneseq
        %v2142 = vshrl.u32 %v2141, 7
        %v2143 = vsub.s32 %v2140, %v2142
        %v2144 = vrot.slane %v2130, %v2143
        %v2145 = vcombine.low %v2121, %v2137
        %v2146 = vcombine.high %v2121, %v2137
        %v2147 = vcombine.low %v2128, %v2144
        %v2148 = vcombine.high %v2128, %v2144
        %2150 = vrot.lane.b32.xlu0 %v2146, 8
        %v2151 = vpop.permute.xlu0 %2150
        %2154 = vrot.lane.b32.xlu0 %v2147, 16
        %v2155 = vpop.permute.xlu0 %2154
        %2158 = vrot.lane.b32.xlu0 %v2148, 24
        %v2159 = vpop.permute.xlu0 %2158
        %v2161 = vsel %vm1372, %v2145, %v2151
        %vm2162 = vcmask 130048
        %v2163 = vsel %vm2162, %v2161, %v2155
        %vm2164 = vcmask 195584
        %v2165 = vsel %vm2164, %v2163, %v2159
        %v2166 = vld [vmem:[#allocation17] sm:$0xff]
        %v2167 = vld [vmem:[#allocation17 + $0x8] sm:$0xff]
        %v2168 = vld [vmem:[#allocation17 + $0x10] sm:$0xff]
        %v2169 = vld [vmem:[#allocation17 + $0x18] sm:$0xff]
        %v2170 = vld [vmem:[#allocation19] sm:$0x1]
        %v2172 = vlaneseq
        %v2173 = vshrl.u32 %v2172, 7
        %v2174 = vsub.s32 0, %v2173
        %v2175 = vrot.slane %v2170, %v2174
        %v2178 = vsel %vm688, %v2165, 0
        %2180 = vmatprep.subr.mxu0 0.0
        %2181 = vmatpush1.msra.mxu0 %v2166
        %2182 = vmatprep.subr.mxu0 0.0
        %2183 = vmatpush1.msra.mxu0 %v2167
        %2184 = vmatprep.subr.mxu0 0.0
        %2185 = vmatpush1.msra.mxu0 %v2168
        %2186 = vmatprep.subr.mxu0 0.0
        %2187 = vmatpush1.msra.mxu0 %v2169
        %2188 = vmatprep.subr.mxu0 0.0
        %2189 = vmatpush1.msra.mxu0 0.0
        %2190 = vmatprep.subr.mxu0 0.0
        %2191 = vmatpush1.msra.mxu0 0.0
        %2192 = vmatprep.subr.mxu0 0.0
        %2193 = vmatpush1.msra.mxu0 0.0
        %2194 = vmatprep.subr.mxu0 0.0
        %2195 = vmatpush1.msra.mxu0 0.0
        %2196 = vmatprep.subr.mxu0 0.0
        %2197 = vmatpush1.msra.mxu0 0.0
        %2198 = vmatprep.subr.mxu0 0.0
        %2199 = vmatpush1.msra.mxu0 0.0
        %2200 = vmatprep.subr.mxu0 0.0
        %2201 = vmatpush1.msra.mxu0 0.0
        %2202 = vmatprep.subr.mxu0 0.0
        %2203 = vmatpush1.msra.mxu0 0.0
        %2204 = vmatprep.subr.mxu0 0.0
        %2205 = vmatpush1.msra.mxu0 0.0
        %2206 = vmatprep.subr.mxu0 0.0
        %2207 = vmatpush1.msra.mxu0 0.0
        %2208 = vmatprep.subr.mxu0 0.0
        %2209 = vmatpush1.msra.mxu0 0.0
        %2210 = vmatprep.subr.mxu0 0.0
        %2211 = vmatpush1.msra.mxu0 0.0
        %2212 = vmatprep.subr.mxu0 0.0
        %2213 = vmatpush1.msra.mxu0 0.0
        %2214 = vmatprep.subr.mxu0 0.0
        %2215 = vmatpush1.msra.mxu0 0.0
        %2216 = vmatprep.subr.mxu0 0.0
        %2217 = vmatpush1.msra.mxu0 0.0
        %2218 = vmatprep.subr.mxu0 0.0
        %2219 = vmatpush1.msra.mxu0 0.0
        %2220 = vmatprep.subr.mxu0 0.0
        %2221 = vmatpush1.msra.mxu0 0.0
        %2222 = vmatprep.subr.mxu0 0.0
        %2223 = vmatpush1.msra.mxu0 0.0
        %2224 = vmatprep.subr.mxu0 0.0
        %2225 = vmatpush1.msra.mxu0 0.0
        %2226 = vmatprep.subr.mxu0 0.0
        %2227 = vmatpush1.msra.mxu0 0.0
        %2228 = vmatprep.subr.mxu0 0.0
        %2229 = vmatpush1.msra.mxu0 0.0
        %2230 = vmatprep.subr.mxu0 0.0
        %2231 = vmatpush1.msra.mxu0 0.0
        %2232 = vmatprep.subr.mxu0 0.0
        %2233 = vmatpush1.msra.mxu0 0.0
        %2234 = vmatprep.subr.mxu0 0.0
        %2235 = vmatpush1.msra.mxu0 0.0
        %2236 = vmatprep.subr.mxu0 0.0
        %2237 = vmatpush1.msra.mxu0 0.0
        %2238 = vmatprep.subr.mxu0 0.0
        %2239 = vmatpush1.msra.mxu0 0.0
        %2240 = vmatprep.subr.mxu0 0.0
        %2241 = vmatpush1.msra.mxu0 0.0
        %2242 = vmatprep.subr.mxu0 0.0
        %2243 = vmatpush1.msra.mxu0 0.0
        %2244 = vmatprep.mubr.f32.mxu0 0.0
        %2245 = vmatmul.mubr.f32.gmra.mrb[0].mxu0 %v2178
        %v2246 = vpop.f32.mrb[0].mxu0
        %v2247 = vadd.f32 %v2175, %v2246
        %v2248 = vpop.f32.mrb[0].mxu0
        %2249 = vdwg.mxu0
        %v2250 = vadd.f32 %v2247, %v674
        %v2251 = vsel %vm688, %v2250, 0.0
        %2252 = vadd.xlane.f32.xlu0 %v2251
        %v2253 = vpop.xlane.xlu0 %2252
        %v2254 = vrcp.pop 32.0
        %v2255 = vmul.f32 %v2253, %v2254
        %v2256 = vsub.f32 %v2250, %v2255
        %v2257 = vmul.f32 %v2256, %v2256
        %v2258 = vsel %vm688, %v2257, 0.0
        %2259 = vadd.xlane.f32.xlu0 %v2258
        %v2260 = vpop.xlane.xlu0 %2259
        %v2261 = vmul.f32 %v2260, %v2254
        %v2262 = vadd.f32 %v2261, 1e-12
        %v2263 = vrsqrt.pop %v2262
        %v2264 = vmul.f32 %v2256, %v2263
        %v2265 = vld [vmem:[#allocation20] sm:$0x1]
        %v2267 = vlaneseq
        %v2268 = vshrl.u32 %v2267, 7
        %v2269 = vsub.s32 0, %v2268
        %v2270 = vrot.slane %v2265, %v2269
        %v2272 = vmul.f32 %v2270, %v2264
        %v2273 = vld [vmem:[#allocation22] sm:$0x1]
        %v2275 = vlaneseq
        %v2276 = vshrl.u32 %v2275, 7
        %v2277 = vsub.s32 0, %v2276
        %v2278 = vrot.slane %v2273, %v2277
        %v2280 = vadd.f32 %v2272, %v2278
        %2281 = vst.msk [vmem:[%s673] sm:$0xff] %vm688, %v2280
        %s2282 = sand.u32 %s350, 1
        %s2283 = scalar_lea.sflag [#allocation4], %s2282
        %s2284 = sand.u32 %s350, 1
        %s2285 = smul.addr %s2284, 8
        %s2286 = scalar_lea.vmem [#allocation23], %s2285
        // Predicated region
        $region125: #{tpu_custom_call.1} parent=71 // pred_check
          %p2287 = pneg %p360
        $region126: #{tpu_custom_call.1} parent=71 // pred_check_branch
          %2289 = sbr.rel (%p2287) target = $region128
        $region127: #{tpu_custom_call.1} parent=71 // pred_region
          %s2291 = ssub.s32 128, 128
          %2292 = vsyncadd %s2283, %s2291
          %s2293 = sadd.s32 %s43, %s42
          %s2294 = smul.addr %s2293, 128
          %s2295 = scalar_lea.hbm %s13, %s2294
          %s2297 = sshll.u32 %s2286, 4
          %s2298 = int_to_ptr.vmem [resolvable:$true] %s2297
          %2300 = dma.vmem_to_hbm [thread:$0]  %s2298, 128, %s2295, %s2283
        $region128: #{tpu_custom_call.1} parent=71 // pred_fallthru
          _
      $region72: #{tpu_custom_call.1} parent=5 // pred_fallthru
        _
      %p2301 = scmp.le.s32.totalorder 2, %s33
      // Predicated region
      $region129: #{tpu_custom_call.1} parent=5 // pred_check
        %p2302 = pneg %p2301
      $region130: #{tpu_custom_call.1} parent=5 // pred_check_branch
        %2304 = sbr.rel (%p2302) target = $region132
      $region131: #{tpu_custom_call.1} parent=5 // pred_region
        %s2305 = ssub.s32 %s33, 2
        // Predicated region
        $region133: #{tpu_custom_call.1} parent=131 // pred_check
          %p2306 = pneg %p366
        $region134: #{tpu_custom_call.1} parent=131 // pred_check_branch
          %2308 = sbr.rel (%p2306) target = $region136
        $region135: #{tpu_custom_call.1} parent=131 // pred_region
          %s2309 = sand.u32 %s351, 1
          %s2310 = scalar_lea.sflag [#allocation4], %s2309
          %s2311 = sand.u32 %s351, 1
          %s2312 = smul.addr %s2311, 8
          %s2313 = scalar_lea.vmem [#allocation23], %s2312
          %2314 = dma.done %s2310, 128
        $region136: #{tpu_custom_call.1} parent=131 // pred_fallthru
          _
      $region132: #{tpu_custom_call.1} parent=5 // pred_fallthru
        _
    $region6: #{tpu_custom_call.1} parent=1 // loop_footer
      %s37 = sadd.s32 1, %s33
    $region7: #{tpu_custom_call.1} parent=1 // loop_footer_branch
      %32 = sbr.rel target = $region3
    $region8: #{tpu_custom_call.1} parent=1 // loop_exit
      _
    %2315 = vsyncpa [#allocation3], 1
    %s2316 = scalar_lea.sflag [#allocation3], 1
    %2317 = vsyncpa %s2316, 1
    %2318 = vsyncpa [#allocation6], 1
    %s2319 = scalar_lea.sflag [#allocation6], 1
    %2320 = vsyncpa %s2319, 1
    %2321 = vsyncpa [#allocation9], 1
    %2322 = vsyncpa [#allocation12], 1
    %2323 = vsyncpa [#allocation15], 1
    %2324 = vsyncpa [#allocation18], 1
    %2325 = vsyncpa [#allocation21], 1
    %2326 = vsyncpa [#allocation4], 1
    %s2327 = scalar_lea.sflag [#allocation4], 1
    %2328 = vsyncpa %s2327, 1

</llo_original>
